<compile_context>
chip_gen: v7x
topology: tpu7x:2x2x1
jax: 0.10.0
libtpu: 0.0.40
codegen_flags: <defaults>
</compile_context>

<pallas_src>
import functools
import math

import jax
import jax.numpy as jnp
from jax import lax
from jax.experimental import pallas as pl
from jax.experimental.pallas import tpu as pltpu

LN_EPS = 1e-5   # PyTorch nn.LayerNorm default
G = 4           # row-groups packed along lanes (feature dims here are <= 32)


def _round_up(x, m):
    return ((x + m - 1) // m) * m


# ---------------------------------------------------------------------------
# Pallas kernel: full (folded, lane-packed) AttentionBlock forward for one
# tile of packed rows.
#   q_ref : (tile_p, G*Dq)      streamed query rows, packed G-per-row
#   kv_ref: (tile_p, G*Dkv)     streamed (or resident periodic) kv rows
#   w_ref : (7, R, C)           block-diagonal packed weight slab
#   a_ref : (G*H, G*H)          segmented averaging matrix (f32)
#   v_ref : (14, Cv)            packed bias / LayerNorm vectors (f32)
#   o_ref : (tile_p, G*out)     packed output (f32)
# ---------------------------------------------------------------------------
def attention_block_kernel(q_ref, kv_ref, w_ref, a_ref, v_ref, o_ref, *,
                           pq, pkv, pe, ph, po, chunk_p, n_chunks, mdt):
    def w(i, di, do):                       # static slice of the weight slab
        return w_ref[i, :di, :do]

    def vec(i, width):                      # static slice of the vector slab
        return v_ref[i:i + 1, :width]       # (1, width), f32

    def mm(a, b):                           # MXU matmul, f32 accumulation
        return jnp.dot(a, b, preferred_element_type=jnp.float32)

    a_mat = a_ref[...]                      # (ph, ph) f32

    def ln(z, gam, bet):                    # per-group LayerNorm via MXU
        mu = mm(z, a_mat)                   # per-group mean, broadcast
        zc = z - mu
        var = mm(zc * zc, a_mat)            # per-group variance, broadcast
        return zc * lax.rsqrt(var + LN_EPS) * gam + bet

    def relu(z):
        return jnp.maximum(z, 0.0)

    def chunk_body(c, carry):
        rows = pl.ds(c * chunk_p, chunk_p)
        qp = q_ref[rows, :]                 # (chunk_p, pq)   matmul dtype
        kvp = kv_ref[rows, :]               # (chunk_p, pkv)  matmul dtype

        # -- pre_mlp with attention (softmax==1) folded in; fused
        #    [lin1 | residual] weight for the kv input.
        t = mm(kvp, w(0, pkv, ph + pe))                       # (chunk_p, ph+pe)
        t0 = relu(ln(t[:, :ph] + vec(0, ph), vec(1, ph), vec(2, ph)))
        t1 = relu(ln(mm(t0.astype(mdt), w(1, ph, ph)) + vec(3, ph),
                     vec(4, ph), vec(5, ph)))
        eps = mm(t1.astype(mdt), w(2, ph, pe)) + t[:, ph:ph + pe] + vec(6, pe)
        eps_m = eps.astype(mdt)

        # -- post_mlp on concat([q, eps]) (split matmuls); fused
        #    [lin1 | residual-through-final] weights for q and eps.
        u = mm(qp, w(3, pq, ph + po)) + mm(eps_m, w(4, pe, ph + po))
        u0 = relu(ln(u[:, :ph] + vec(7, ph), vec(8, ph), vec(9, ph)))
        u1 = relu(ln(mm(u0.astype(mdt), w(5, ph, ph)) + vec(10, ph),
                     vec(11, ph), vec(12, ph)))
        out = mm(u1.astype(mdt), w(6, ph, po)) + u[:, ph:ph + po] + vec(13, po)

        o_ref[rows, :] = out.astype(o_ref.dtype)
        return carry

    if n_chunks == 1:
        chunk_body(0, 0)
    else:
        lax.fori_loop(0, n_chunks, chunk_body, 0)


# ---------------------------------------------------------------------------
# Parameter construction (deterministic, PyTorch-like uniform init) — produces
# the UNFOLDED per-layer parameters, exactly mirroring the nn.Module layout.
# ---------------------------------------------------------------------------
def init_params(key, *, query_dim, kv_dim, out_dim, outerprod_dim, n_hidden_mlp):
    E, H, Dq, Dkv = outerprod_dim, n_hidden_mlp, query_dim, kv_dim
    Dc = Dq + E  # post_mlp input dim

    keys = list(jax.random.split(key, 64))
    kidx = [0]

    def nextkey():
        k = keys[kidx[0]]
        kidx[0] += 1
        return k

    def linear(in_d, out_d):
        lim = 1.0 / (in_d ** 0.5)
        w = jax.random.uniform(nextkey(), (in_d, out_d), jnp.float32, -lim, lim)
        b = jax.random.uniform(nextkey(), (1, out_d), jnp.float32, -lim, lim)
        return w, b

    ones = lambda d: jnp.ones((1, d), jnp.float32)
    zeros = lambda d: jnp.zeros((1, d), jnp.float32)

    params = []
    # kv_proj
    params += list(linear(Dkv, E))
    # attention: V in-projection (last third of in_proj_weight) and out_proj
    params += list(linear(E, E))
    params += list(linear(E, E))
    # pre_mlp (in=E, hidden=H, out=E)
    if E == H:
        params += [jnp.eye(E, H, dtype=jnp.float32), zeros(H)]     # Identity proj
    else:
        params += list(linear(E, H))                                # input_residual_proj
    params += list(linear(E, H))                                    # block lin1
    params += [ones(H), zeros(H)]                                   # ln1
    params += list(linear(H, H))                                    # block lin2
    params += [ones(H), zeros(H)]                                   # ln2
    params += list(linear(H, E))                                    # final
    # post_mlp (in=Dc, hidden=H, out=out_dim)
    if Dc == H:
        rp_w, rp_b = jnp.eye(Dc, H, dtype=jnp.float32), zeros(H)    # nn.Identity
    else:
        rp_w, rp_b = linear(Dc, H)
    params += [rp_w[:Dq], rp_w[Dq:], rp_b]
    l1_w, l1_b = linear(Dc, H)
    params += [l1_w[:Dq], l1_w[Dq:], l1_b]
    params += [ones(H), zeros(H)]
    params += list(linear(H, H))
    params += [ones(H), zeros(H)]
    params += list(linear(H, out_dim))
    return params


# ---------------------------------------------------------------------------
# Host-side exact folding of all pure-linear chains (associativity only).
# ---------------------------------------------------------------------------
def fold_params(params):
    (kvp_w, kvp_b, av_w, av_b, ao_w, ao_b,
     pre_rp_w, pre_rp_b, pre_l1_w, pre_l1_b, pre_ln1_g, pre_ln1_b,
     pre_l2_w, pre_l2_b, pre_ln2_g, pre_ln2_b, pre_f_w, pre_f_b,
     post_rp_wq, post_rp_we, post_rp_b,
     post_l1_wq, post_l1_we, post_l1_b, post_ln1_g, post_ln1_b,
     post_l2_w, post_l2_b, post_ln2_g, post_ln2_b, post_f_w, post_f_b) = params

    # attention (seq_len==1, softmax==1): attn_out = kv @ W_att + b_att
    W_att = kvp_w @ av_w @ ao_w                                   # (Dkv, E)
    b_att = (kvp_b @ av_w + av_b) @ ao_w + ao_b                   # (1, E)

    # fold attention into pre_mlp's first linear and residual path
    w_pre_l1 = W_att @ pre_l1_w                                   # (Dkv, H)
    b_pre_l1 = b_att @ pre_l1_w + pre_l1_b                        # (1, H)
    w_pre_res = W_att @ pre_rp_w @ pre_f_w                        # (Dkv, E)
    b_eps = (b_att @ pre_rp_w + pre_rp_b) @ pre_f_w + pre_f_b     # (1, E)

    # fold post_mlp residual projection through its final linear
    w_post_res_q = post_rp_wq @ post_f_w                          # (Dq, out)
    w_post_res_e = post_rp_we @ post_f_w                          # (E, out)
    b_out = post_rp_b @ post_f_w + post_f_b                       # (1, out)

    weights = [w_pre_l1, pre_l2_w, pre_f_w, w_pre_res,
               post_l1_wq, post_l1_we, post_l2_w, post_f_w,
               w_post_res_q, w_post_res_e]
    vectors = [b_pre_l1, pre_ln1_g, pre_ln1_b, pre_l2_b, pre_ln2_g, pre_ln2_b,
               b_eps, post_l1_b, post_ln1_g, post_ln1_b, post_l2_b,
               post_ln2_g, post_ln2_b, b_out]
    return weights, vectors


# ---------------------------------------------------------------------------
# Wrapper: folding / lane-packing glue + pallas_call
# ---------------------------------------------------------------------------
def attention_block_forward(params, query_embed, kv_embed, *,
                            tile_rows=1024, chunk_rows=128,
                            use_bf16_matmul=False, min_grid_steps=1):
    orig_ndim = query_embed.ndim
    S = B = -1
    kv_unique = None
    if orig_ndim == 3:
        S, B = query_embed.shape[0], query_embed.shape[1]
        q_flat = query_embed.reshape(S * B, -1)
        if kv_embed.ndim == 2:
            if B >= G and B % G == 0:
                kv_unique = kv_embed          # broadcast over S handled below
                kv_flat = None
            else:
                # TODO(synk): rare fallback (B not a multiple of G) duplicates
                # kv host-side; all test shapes take the resident path.
                kv_flat = jnp.broadcast_to(
                    kv_embed[None], (S, B, kv_embed.shape[-1])).reshape(S * B, -1)
        else:
            kv_flat = kv_embed.reshape(S * B, -1)
    elif orig_ndim == 2:
        q_flat, kv_flat = query_embed, kv_embed
    else:
        raise ValueError("query_embed must be 2D or 3D")

    N, Dq_in = q_flat.shape
    mdt = jnp.bfloat16 if use_bf16_matmul else jnp.float32

    # ---- fold all pure-linear chains (exact) --------------------------------
    weights, vectors = fold_params(params)
    (w_pre_l1, pre_l2_w, pre_f_w, w_pre_res,
     post_l1_wq, post_l1_we, post_l2_w, post_f_w,
     w_post_res_q, w_post_res_e) = weights
    Dkv = w_pre_l1.shape[0]
    H = w_pre_l1.shape[1]
    E = pre_f_w.shape[1]
    Dq = post_l1_wq.shape[0]
    out_dim = post_f_w.shape[1]
    assert Dq == Dq_in

    PQ, PKV, PE, PH, PO = G * Dq, G * Dkv, G * E, G * H, G * out_dim

    # ---- block-diagonal lane packing + shared-LHS fusion of weights ---------
    pk = lambda wt: jnp.kron(jnp.eye(G, dtype=wt.dtype), wt)
    packed_ws = [
        jnp.concatenate([pk(w_pre_l1), pk(w_pre_res)], axis=1),       # kv  -> [h | eps_res]
        pk(pre_l2_w),
        pk(pre_f_w),
        jnp.concatenate([pk(post_l1_wq), pk(w_post_res_q)], axis=1),  # q   -> [h | out_res]
        jnp.concatenate([pk(post_l1_we), pk(w_post_res_e)], axis=1),  # eps -> [h | out_res]
        pk(post_l2_w),
        pk(post_f_w),
    ]
    R = _round_up(max(wm.shape[0] for wm in packed_ws), 8)
    C = _round_up(max(wm.shape[1] for wm in packed_ws), 128)
    w_slab = jnp.stack([
        jnp.pad(wm, ((0, R - wm.shape[0]), (0, C - wm.shape[1])))
        for wm in packed_ws
    ]).astype(mdt)                                            # (7, R, C)

    # segmented averaging matrix for the packed per-group LayerNorm (f32)
    a_mat = jnp.kron(jnp.eye(G, dtype=jnp.float32),
                     jnp.full((H, H), 1.0 / H, jnp.float32))  # (PH, PH)

    Cv = _round_up(max(G * v.shape[1] for v in vectors), 128)
    v_slab = jnp.concatenate([
        jnp.pad(jnp.tile(v, (1, G)), ((0, 0), (0, Cv - G * v.shape[1])))
        for v in vectors
    ], axis=0).astype(jnp.float32)                            # (14, Cv)

    # ---- row packing: G consecutive rows per packed row (free reshape) ------
    rem = (-N) % G
    if rem:
        q_flat = jnp.pad(q_flat, ((0, rem), (0, 0)))
        if kv_flat is not None:
            kv_flat = jnp.pad(kv_flat, ((0, rem), (0, 0)))
    Ng = N + rem
    NP = Ng // G

    # ---- tile / chunk selection ---------------------------------------------
    np8 = _round_up(NP, 8)
    chunk_p = min(max(8, _round_up(chunk_rows // G, 8)), np8)
    tile_p = max(chunk_p, _round_up(max(tile_rows // G, chunk_p), chunk_p))
    tile_p = min(tile_p, _round_up(np8, chunk_p))
    if min_grid_steps > 1:      # e.g. 2 on v7x so both TensorCores get work
        cap = max(chunk_p, _round_up(pl.cdiv(NP, min_grid_steps), chunk_p))
        tile_p = min(tile_p, cap)
    if kv_unique is not None:   # keep the resident kv block tile-periodic
        bg = B // G
        if tile_p % bg:
            tile_p = _round_up(tile_p, (chunk_p * bg) // math.gcd(chunk_p, bg))
    n_chunks = tile_p // chunk_p
    grid = pl.cdiv(NP, tile_p)

    q_packed = q_flat.reshape(NP, PQ).astype(mdt)
    if kv_unique is not None:
        # One tile's worth of kv rows (periodic with period B/G packed rows),
        # reused by every grid step via a constant index_map: no O(N) host
        # broadcast, no S-fold kv HBM duplication.
        bg = B // G
        kv_arr = jnp.tile(kv_unique.reshape(bg, PKV), (tile_p // bg, 1)).astype(mdt)
        kv_spec = pl.BlockSpec((tile_p, PKV), lambda i: (0, 0))
    else:
        kv_arr = kv_flat.reshape(NP, PKV).astype(mdt)
        kv_spec = pl.BlockSpec((tile_p, PKV), lambda i: (i, 0))

    kernel = functools.partial(
        attention_block_kernel,
        pq=PQ, pkv=PKV, pe=PE, ph=PH, po=PO,
        chunk_p=chunk_p, n_chunks=n_chunks, mdt=mdt)

    out_packed = pl.pallas_call(
        kernel,
        out_shape=jax.ShapeDtypeStruct((NP, PO), jnp.float32),
        grid_spec=pltpu.PrefetchScalarGridSpec(
            num_scalar_prefetch=0,
            grid=(grid,),
            in_specs=[
                pl.BlockSpec((tile_p, PQ), lambda i: (i, 0)),
                kv_spec,
                pl.BlockSpec(tuple(w_slab.shape), lambda i: (0, 0, 0)),
                pl.BlockSpec(tuple(a_mat.shape), lambda i: (0, 0)),
                pl.BlockSpec(tuple(v_slab.shape), lambda i: (0, 0)),
            ],
            out_specs=pl.BlockSpec((tile_p, PO), lambda i: (i, 0)),
        ),
        compiler_params=pltpu.CompilerParams(
            dimension_semantics=("parallel",)),
    )(q_packed, kv_arr, w_slab, a_mat, v_slab)

    out_flat = out_packed.reshape(Ng, out_dim)[:N]   # free lane-unpack reshape
    if orig_ndim == 3:
        return out_flat.reshape(S, B, out_dim)
    return out_flat


# ---------------------------------------------------------------------------
# Pure-JAX reference on the ORIGINAL (unfolded) parameters — same math as the
# PyTorch module at these call conditions — for correctness checking.
# ---------------------------------------------------------------------------
def reference_forward(params, q_flat, kv_flat):
    (kvp_w, kvp_b, av_w, av_b, ao_w, ao_b,
     pre_rp_w, pre_rp_b, pre_l1_w, pre_l1_b, pre_ln1_g, pre_ln1_b,
     pre_l2_w, pre_l2_b, pre_ln2_g, pre_ln2_b, pre_f_w, pre_f_b,
     post_rp_wq, post_rp_we, post_rp_b,
     post_l1_wq, post_l1_we, post_l1_b, post_ln1_g, post_ln1_b,
     post_l2_w, post_l2_b, post_ln2_g, post_ln2_b, post_f_w, post_f_b) = params

    def ln(x, g, b):
        mu = x.mean(-1, keepdims=True)
        xc = x - mu
        var = (xc * xc).mean(-1, keepdims=True)
        return xc / jnp.sqrt(var + LN_EPS) * g + b

    kp = kv_flat @ kvp_w + kvp_b
    attn = (kp @ av_w + av_b) @ ao_w + ao_b
    h = jnp.maximum(ln(attn @ pre_l1_w + pre_l1_b, pre_ln1_g, pre_ln1_b), 0.0)
    h = jnp.maximum(ln(h @ pre_l2_w + pre_l2_b, pre_ln2_g, pre_ln2_b), 0.0)
    eps = (h + attn @ pre_rp_w + pre_rp_b) @ pre_f_w + pre_f_b
    h1 = q_flat @ post_l1_wq + eps @ post_l1_we + post_l1_b
    h1 = jnp.maximum(ln(h1, post_ln1_g, post_ln1_b), 0.0)
    h1 = jnp.maximum(ln(h1 @ post_l2_w + post_l2_b, post_ln2_g, post_ln2_b), 0.0)
    res = q_flat @ post_rp_wq + eps @ post_rp_we + post_rp_b
    return (h1 + res) @ post_f_w + post_f_b


# ---------------------------------------------------------------------------
if __name__ == "__main__":
    # Module hyper-params (small, consistent with the forward pass)
    QUERY_DIM = 16
    KV_DIM = 16
    OUT_DIM = 8            # use_map=True -> single output tensor of this width
    OUTERPROD_DIM = 16
    N_HIDDEN_MLP = 32
    S, B = 2, 8            # 3D query (S, B, Dq); 2D kv (B, Dkv) -> broadcast over S

    root = jax.random.PRNGKey(0)
    k_par, k_q, k_kv, k_q2, k_kv2 = jax.random.split(root, 5)

    params = init_params(
        k_par,
        query_dim=QUERY_DIM, kv_dim=KV_DIM, out_dim=OUT_DIM,
        outerprod_dim=OUTERPROD_DIM, n_hidden_mlp=N_HIDDEN_MLP,
    )

    query_embed = jax.random.normal(k_q, (S, B, QUERY_DIM), jnp.float32)
    kv_embed = jax.random.normal(k_kv, (B, KV_DIM), jnp.float32)

    # reference (unfolded math)
    q_flat = query_embed.reshape(S * B, -1)
    kv_flat = jnp.broadcast_to(kv_embed[None], (S, B, KV_DIM)).reshape(S * B, -1)
    ref = reference_forward(params, q_flat, kv_flat).reshape(S, B, OUT_DIM)

    # 1) module-like call: 3D query + 2D kv (resident kv block, f32 matmuls)
    out = attention_block_forward(params, query_embed, kv_embed)
    out = jax.block_until_ready(out)
    assert out.shape == (S, B, OUT_DIM), out.shape
    assert jnp.allclose(out, ref, rtol=2e-3, atol=2e-3), \
        float(jnp.max(jnp.abs(out - ref)))

    # 2) bf16 matmul path (recommended on v6e/v7x); looser tolerance
    out_bf16 = attention_block_forward(params, query_embed, kv_embed,
                                       use_bf16_matmul=True)
    out_bf16 = jax.block_until_ready(out_bf16)
    assert out_bf16.shape == (S, B, OUT_DIM), out_bf16.shape
    assert jnp.allclose(out_bf16, ref, rtol=1e-1, atol=1e-1), \
        float(jnp.max(jnp.abs(out_bf16 - ref)))

    # 3) 2D query + 2D kv, larger row count: exercises streamed kv, the
    #    multi-chunk fori_loop, a multi-step grid and a partial last block.
    N2 = 400
    q2 = jax.random.normal(k_q2, (N2, QUERY_DIM), jnp.float32)
    kv2 = jax.random.normal(k_kv2, (N2, KV_DIM), jnp.float32)
    ref2 = reference_forward(params, q2, kv2)
    out2 = attention_block_forward(params, q2, kv2,
                                   tile_rows=256, chunk_rows=64)
    out2 = jax.block_until_ready(out2)
    assert out2.shape == (N2, OUT_DIM), out2.shape
    assert jnp.allclose(out2, ref2, rtol=2e-3, atol=2e-3), \
        float(jnp.max(jnp.abs(out2 - ref2)))

    print("KERNEL_OK")
</pallas_src>

<mosaic_0001>
module attributes {stable_mosaic.version = 11 : i64} {
  func.func @attention_block_kernel(%arg0: i32, %arg1: memref<8x64xf32, #tpu.memory_space<vmem>>, %arg2: memref<8x64xf32, #tpu.memory_space<vmem>>, %arg3: memref<7x128x256xf32, #tpu.memory_space<vmem>>, %arg4: memref<128x128xf32, #tpu.memory_space<vmem>>, %arg5: memref<14x128xf32, #tpu.memory_space<vmem>>, %arg6: memref<8x32xf32, #tpu.memory_space<vmem>>) attributes {dimension_semantics = [#tpu.dimension_semantics<parallel>], iteration_bounds = array<i64: 1>, scalar_prefetch = 0 : i64, scratch_operands = 0 : i64, tpu.core_type = #tpu.core_type<tc>, window_params = [{transform_indices = @transform_0, window_bounds = array<i64: 8, 64>}, {pipeline_mode = #tpu.pipeline_mode<synchronous>, transform_indices = @transform_1, window_bounds = array<i64: 8, 64>}, {pipeline_mode = #tpu.pipeline_mode<synchronous>, transform_indices = @transform_2, window_bounds = array<i64: 7, 128, 256>}, {pipeline_mode = #tpu.pipeline_mode<synchronous>, transform_indices = @transform_3, window_bounds = array<i64: 128, 128>}, {pipeline_mode = #tpu.pipeline_mode<synchronous>, transform_indices = @transform_4, window_bounds = array<i64: 14, 128>}, {transform_indices = @transform_5, window_bounds = array<i64: 8, 32>}]} {
    %c0 = arith.constant 0 : index
    %c0_0 = arith.constant 0 : index
    %0 = vector.load %arg4[%c0, %c0_0] : memref<128x128xf32, #tpu.memory_space<vmem>>, vector<128x128xf32>
    %c0_1 = arith.constant 0 : index
    %c0_2 = arith.constant 0 : index
    %1 = vector.load %arg1[%c0_1, %c0_2] : memref<8x64xf32, #tpu.memory_space<vmem>>, vector<8x64xf32>
    %c0_3 = arith.constant 0 : index
    %c0_4 = arith.constant 0 : index
    %2 = vector.load %arg2[%c0_3, %c0_4] : memref<8x64xf32, #tpu.memory_space<vmem>>, vector<8x64xf32>
    %c0_5 = arith.constant 0 : index
    %c0_6 = arith.constant 0 : index
    %c0_7 = arith.constant 0 : index
    %3 = vector.load %arg3[%c0_5, %c0_6, %c0_7] : memref<7x128x256xf32, #tpu.memory_space<vmem>>, vector<1x64x192xf32>
    %4 = vector.shape_cast %3 : vector<1x64x192xf32> to vector<64x192xf32>
    %cst = arith.constant dense<0.000000e+00> : vector<8x192xf32>
    %5 = tpu.matmul %2, %4, %cst {dimension_numbers = #tpu.dot_dimension_numbers<[1], [0], [0], [1], [0, 0, 1, 1], [], []>} : vector<8x64xf32>, vector<64x192xf32>, vector<8x192xf32> -> vector<8x192xf32>
    %6 = vector.extract_strided_slice %5 {offsets = [0, 0], sizes = [8, 128], strides = [1, 1]} : vector<8x192xf32> to vector<8x128xf32>
    %c0_8 = arith.constant 0 : index
    %c0_9 = arith.constant 0 : index
    %7 = vector.load %arg5[%c0_8, %c0_9] : memref<14x128xf32, #tpu.memory_space<vmem>>, vector<1x128xf32>
    %8 = vector.broadcast %7 : vector<1x128xf32> to vector<8x128xf32>
    %9 = arith.addf %6, %8 : vector<8x128xf32>
    %c1 = arith.constant 1 : index
    %c0_10 = arith.constant 0 : index
    %10 = vector.load %arg5[%c1, %c0_10] : memref<14x128xf32, #tpu.memory_space<vmem>>, vector<1x128xf32>
    %c2 = arith.constant 2 : index
    %c0_11 = arith.constant 0 : index
    %11 = vector.load %arg5[%c2, %c0_11] : memref<14x128xf32, #tpu.memory_space<vmem>>, vector<1x128xf32>
    %cst_12 = arith.constant dense<0.000000e+00> : vector<8x128xf32>
    %12 = tpu.matmul %9, %0, %cst_12 {dimension_numbers = #tpu.dot_dimension_numbers<[1], [0], [0], [1], [0, 0, 1, 1], [], []>} : vector<8x128xf32>, vector<128x128xf32>, vector<8x128xf32> -> vector<8x128xf32>
    %13 = arith.subf %9, %12 : vector<8x128xf32>
    %14 = arith.mulf %13, %13 : vector<8x128xf32>
    %cst_13 = arith.constant dense<0.000000e+00> : vector<8x128xf32>
    %15 = tpu.matmul %14, %0, %cst_13 {dimension_numbers = #tpu.dot_dimension_numbers<[1], [0], [0], [1], [0, 0, 1, 1], [], []>} : vector<8x128xf32>, vector<128x128xf32>, vector<8x128xf32> -> vector<8x128xf32>
    %cst_14 = arith.constant 9.99999974E-6 : f32
    %16 = vector.broadcast %cst_14 : f32 to vector<8x128xf32>
    %17 = arith.addf %15, %16 : vector<8x128xf32>
    %18 = math.rsqrt %17 : vector<8x128xf32>
    %19 = arith.mulf %13, %18 : vector<8x128xf32>
    %20 = vector.broadcast %10 : vector<1x128xf32> to vector<8x128xf32>
    %21 = arith.mulf %19, %20 : vector<8x128xf32>
    %22 = vector.broadcast %11 : vector<1x128xf32> to vector<8x128xf32>
    %23 = arith.addf %21, %22 : vector<8x128xf32>
    %cst_15 = arith.constant 0.000000e+00 : f32
    %24 = vector.broadcast %cst_15 : f32 to vector<8x128xf32>
    %25 = arith.maximumf %23, %24 : vector<8x128xf32>
    %c1_16 = arith.constant 1 : index
    %c0_17 = arith.constant 0 : index
    %c0_18 = arith.constant 0 : index
    %26 = vector.load %arg3[%c1_16, %c0_17, %c0_18] : memref<7x128x256xf32, #tpu.memory_space<vmem>>, vector<1x128x128xf32>
    %27 = vector.shape_cast %26 : vector<1x128x128xf32> to vector<128x128xf32>
    %cst_19 = arith.constant dense<0.000000e+00> : vector<8x128xf32>
    %28 = tpu.matmul %25, %27, %cst_19 {dimension_numbers = #tpu.dot_dimension_numbers<[1], [0], [0], [1], [0, 0, 1, 1], [], []>} : vector<8x128xf32>, vector<128x128xf32>, vector<8x128xf32> -> vector<8x128xf32>
    %c3 = arith.constant 3 : index
    %c0_20 = arith.constant 0 : index
    %29 = vector.load %arg5[%c3, %c0_20] : memref<14x128xf32, #tpu.memory_space<vmem>>, vector<1x128xf32>
    %30 = vector.broadcast %29 : vector<1x128xf32> to vector<8x128xf32>
    %31 = arith.addf %28, %30 : vector<8x128xf32>
    %c4 = arith.constant 4 : index
    %c0_21 = arith.constant 0 : index
    %32 = vector.load %arg5[%c4, %c0_21] : memref<14x128xf32, #tpu.memory_space<vmem>>, vector<1x128xf32>
    %c5 = arith.constant 5 : index
    %c0_22 = arith.constant 0 : index
    %33 = vector.load %arg5[%c5, %c0_22] : memref<14x128xf32, #tpu.memory_space<vmem>>, vector<1x128xf32>
    %cst_23 = arith.constant dense<0.000000e+00> : vector<8x128xf32>
    %34 = tpu.matmul %31, %0, %cst_23 {dimension_numbers = #tpu.dot_dimension_numbers<[1], [0], [0], [1], [0, 0, 1, 1], [], []>} : vector<8x128xf32>, vector<128x128xf32>, vector<8x128xf32> -> vector<8x128xf32>
    %35 = arith.subf %31, %34 : vector<8x128xf32>
    %36 = arith.mulf %35, %35 : vector<8x128xf32>
    %cst_24 = arith.constant dense<0.000000e+00> : vector<8x128xf32>
    %37 = tpu.matmul %36, %0, %cst_24 {dimension_numbers = #tpu.dot_dimension_numbers<[1], [0], [0], [1], [0, 0, 1, 1], [], []>} : vector<8x128xf32>, vector<128x128xf32>, vector<8x128xf32> -> vector<8x128xf32>
    %cst_25 = arith.constant 9.99999974E-6 : f32
    %38 = vector.broadcast %cst_25 : f32 to vector<8x128xf32>
    %39 = arith.addf %37, %38 : vector<8x128xf32>
    %40 = math.rsqrt %39 : vector<8x128xf32>
    %41 = arith.mulf %35, %40 : vector<8x128xf32>
    %42 = vector.broadcast %32 : vector<1x128xf32> to vector<8x128xf32>
    %43 = arith.mulf %41, %42 : vector<8x128xf32>
    %44 = vector.broadcast %33 : vector<1x128xf32> to vector<8x128xf32>
    %45 = arith.addf %43, %44 : vector<8x128xf32>
    %cst_26 = arith.constant 0.000000e+00 : f32
    %46 = vector.broadcast %cst_26 : f32 to vector<8x128xf32>
    %47 = arith.maximumf %45, %46 : vector<8x128xf32>
    %c2_27 = arith.constant 2 : index
    %c0_28 = arith.constant 0 : index
    %c0_29 = arith.constant 0 : index
    %48 = vector.load %arg3[%c2_27, %c0_28, %c0_29] : memref<7x128x256xf32, #tpu.memory_space<vmem>>, vector<1x128x64xf32>
    %49 = vector.shape_cast %48 : vector<1x128x64xf32> to vector<128x64xf32>
    %cst_30 = arith.constant dense<0.000000e+00> : vector<8x64xf32>
    %50 = tpu.matmul %47, %49, %cst_30 {dimension_numbers = #tpu.dot_dimension_numbers<[1], [0], [0], [1], [0, 0, 1, 1], [], []>} : vector<8x128xf32>, vector<128x64xf32>, vector<8x64xf32> -> vector<8x64xf32>
    %51 = vector.extract_strided_slice %5 {offsets = [0, 128], sizes = [8, 64], strides = [1, 1]} : vector<8x192xf32> to vector<8x64xf32>
    %52 = arith.addf %50, %51 : vector<8x64xf32>
    %c6 = arith.constant 6 : index
    %c0_31 = arith.constant 0 : index
    %53 = vector.load %arg5[%c6, %c0_31] : memref<14x128xf32, #tpu.memory_space<vmem>>, vector<1x64xf32>
    %54 = vector.broadcast %53 : vector<1x64xf32> to vector<8x64xf32>
    %55 = arith.addf %52, %54 : vector<8x64xf32>
    %c3_32 = arith.constant 3 : index
    %c0_33 = arith.constant 0 : index
    %c0_34 = arith.constant 0 : index
    %56 = vector.load %arg3[%c3_32, %c0_33, %c0_34] : memref<7x128x256xf32, #tpu.memory_space<vmem>>, vector<1x64x160xf32>
    %57 = vector.shape_cast %56 : vector<1x64x160xf32> to vector<64x160xf32>
    %cst_35 = arith.constant dense<0.000000e+00> : vector<8x160xf32>
    %58 = tpu.matmul %1, %57, %cst_35 {dimension_numbers = #tpu.dot_dimension_numbers<[1], [0], [0], [1], [0, 0, 1, 1], [], []>} : vector<8x64xf32>, vector<64x160xf32>, vector<8x160xf32> -> vector<8x160xf32>
    %c4_36 = arith.constant 4 : index
    %c0_37 = arith.constant 0 : index
    %c0_38 = arith.constant 0 : index
    %59 = vector.load %arg3[%c4_36, %c0_37, %c0_38] : memref<7x128x256xf32, #tpu.memory_space<vmem>>, vector<1x64x160xf32>
    %60 = vector.shape_cast %59 : vector<1x64x160xf32> to vector<64x160xf32>
    %cst_39 = arith.constant dense<0.000000e+00> : vector<8x160xf32>
    %61 = tpu.matmul %55, %60, %cst_39 {dimension_numbers = #tpu.dot_dimension_numbers<[1], [0], [0], [1], [0, 0, 1, 1], [], []>} : vector<8x64xf32>, vector<64x160xf32>, vector<8x160xf32> -> vector<8x160xf32>
    %62 = arith.addf %58, %61 : vector<8x160xf32>
    %63 = vector.extract_strided_slice %62 {offsets = [0, 0], sizes = [8, 128], strides = [1, 1]} : vector<8x160xf32> to vector<8x128xf32>
    %c7 = arith.constant 7 : index
    %c0_40 = arith.constant 0 : index
    %64 = vector.load %arg5[%c7, %c0_40] : memref<14x128xf32, #tpu.memory_space<vmem>>, vector<1x128xf32>
    %65 = vector.broadcast %64 : vector<1x128xf32> to vector<8x128xf32>
    %66 = arith.addf %63, %65 : vector<8x128xf32>
    %c8 = arith.constant 8 : index
    %c0_41 = arith.constant 0 : index
    %67 = vector.load %arg5[%c8, %c0_41] : memref<14x128xf32, #tpu.memory_space<vmem>>, vector<1x128xf32>
    %c9 = arith.constant 9 : index
    %c0_42 = arith.constant 0 : index
    %68 = vector.load %arg5[%c9, %c0_42] : memref<14x128xf32, #tpu.memory_space<vmem>>, vector<1x128xf32>
    %cst_43 = arith.constant dense<0.000000e+00> : vector<8x128xf32>
    %69 = tpu.matmul %66, %0, %cst_43 {dimension_numbers = #tpu.dot_dimension_numbers<[1], [0], [0], [1], [0, 0, 1, 1], [], []>} : vector<8x128xf32>, vector<128x128xf32>, vector<8x128xf32> -> vector<8x128xf32>
    %70 = arith.subf %66, %69 : vector<8x128xf32>
    %71 = arith.mulf %70, %70 : vector<8x128xf32>
    %cst_44 = arith.constant dense<0.000000e+00> : vector<8x128xf32>
    %72 = tpu.matmul %71, %0, %cst_44 {dimension_numbers = #tpu.dot_dimension_numbers<[1], [0], [0], [1], [0, 0, 1, 1], [], []>} : vector<8x128xf32>, vector<128x128xf32>, vector<8x128xf32> -> vector<8x128xf32>
    %cst_45 = arith.constant 9.99999974E-6 : f32
    %73 = vector.broadcast %cst_45 : f32 to vector<8x128xf32>
    %74 = arith.addf %72, %73 : vector<8x128xf32>
    %75 = math.rsqrt %74 : vector<8x128xf32>
    %76 = arith.mulf %70, %75 : vector<8x128xf32>
    %77 = vector.broadcast %67 : vector<1x128xf32> to vector<8x128xf32>
    %78 = arith.mulf %76, %77 : vector<8x128xf32>
    %79 = vector.broadcast %68 : vector<1x128xf32> to vector<8x128xf32>
    %80 = arith.addf %78, %79 : vector<8x128xf32>
    %cst_46 = arith.constant 0.000000e+00 : f32
    %81 = vector.broadcast %cst_46 : f32 to vector<8x128xf32>
    %82 = arith.maximumf %80, %81 : vector<8x128xf32>
    %c5_47 = arith.constant 5 : index
    %c0_48 = arith.constant 0 : index
    %c0_49 = arith.constant 0 : index
    %83 = vector.load %arg3[%c5_47, %c0_48, %c0_49] : memref<7x128x256xf32, #tpu.memory_space<vmem>>, vector<1x128x128xf32>
    %84 = vector.shape_cast %83 : vector<1x128x128xf32> to vector<128x128xf32>
    %cst_50 = arith.constant dense<0.000000e+00> : vector<8x128xf32>
    %85 = tpu.matmul %82, %84, %cst_50 {dimension_numbers = #tpu.dot_dimension_numbers<[1], [0], [0], [1], [0, 0, 1, 1], [], []>} : vector<8x128xf32>, vector<128x128xf32>, vector<8x128xf32> -> vector<8x128xf32>
    %c10 = arith.constant 10 : index
    %c0_51 = arith.constant 0 : index
    %86 = vector.load %arg5[%c10, %c0_51] : memref<14x128xf32, #tpu.memory_space<vmem>>, vector<1x128xf32>
    %87 = vector.broadcast %86 : vector<1x128xf32> to vector<8x128xf32>
    %88 = arith.addf %85, %87 : vector<8x128xf32>
    %c11 = arith.constant 11 : index
    %c0_52 = arith.constant 0 : index
    %89 = vector.load %arg5[%c11, %c0_52] : memref<14x128xf32, #tpu.memory_space<vmem>>, vector<1x128xf32>
    %c12 = arith.constant 12 : index
    %c0_53 = arith.constant 0 : index
    %90 = vector.load %arg5[%c12, %c0_53] : memref<14x128xf32, #tpu.memory_space<vmem>>, vector<1x128xf32>
    %cst_54 = arith.constant dense<0.000000e+00> : vector<8x128xf32>
    %91 = tpu.matmul %88, %0, %cst_54 {dimension_numbers = #tpu.dot_dimension_numbers<[1], [0], [0], [1], [0, 0, 1, 1], [], []>} : vector<8x128xf32>, vector<128x128xf32>, vector<8x128xf32> -> vector<8x128xf32>
    %92 = arith.subf %88, %91 : vector<8x128xf32>
    %93 = arith.mulf %92, %92 : vector<8x128xf32>
    %cst_55 = arith.constant dense<0.000000e+00> : vector<8x128xf32>
    %94 = tpu.matmul %93, %0, %cst_55 {dimension_numbers = #tpu.dot_dimension_numbers<[1], [0], [0], [1], [0, 0, 1, 1], [], []>} : vector<8x128xf32>, vector<128x128xf32>, vector<8x128xf32> -> vector<8x128xf32>
    %cst_56 = arith.constant 9.99999974E-6 : f32
    %95 = vector.broadcast %cst_56 : f32 to vector<8x128xf32>
    %96 = arith.addf %94, %95 : vector<8x128xf32>
    %97 = math.rsqrt %96 : vector<8x128xf32>
    %98 = arith.mulf %92, %97 : vector<8x128xf32>
    %99 = vector.broadcast %89 : vector<1x128xf32> to vector<8x128xf32>
    %100 = arith.mulf %98, %99 : vector<8x128xf32>
    %101 = vector.broadcast %90 : vector<1x128xf32> to vector<8x128xf32>
    %102 = arith.addf %100, %101 : vector<8x128xf32>
    %cst_57 = arith.constant 0.000000e+00 : f32
    %103 = vector.broadcast %cst_57 : f32 to vector<8x128xf32>
    %104 = arith.maximumf %102, %103 : vector<8x128xf32>
    %c6_58 = arith.constant 6 : index
    %c0_59 = arith.constant 0 : index
    %c0_60 = arith.constant 0 : index
    %105 = vector.load %arg3[%c6_58, %c0_59, %c0_60] : memref<7x128x256xf32, #tpu.memory_space<vmem>>, vector<1x128x32xf32>
    %106 = vector.shape_cast %105 : vector<1x128x32xf32> to vector<128x32xf32>
    %cst_61 = arith.constant dense<0.000000e+00> : vector<8x32xf32>
    %107 = tpu.matmul %104, %106, %cst_61 {dimension_numbers = #tpu.dot_dimension_numbers<[1], [0], [0], [1], [0, 0, 1, 1], [], []>} : vector<8x128xf32>, vector<128x32xf32>, vector<8x32xf32> -> vector<8x32xf32>
    %108 = vector.extract_strided_slice %62 {offsets = [0, 128], sizes = [8, 32], strides = [1, 1]} : vector<8x160xf32> to vector<8x32xf32>
    %109 = arith.addf %107, %108 : vector<8x32xf32>
    %c13 = arith.constant 13 : index
    %c0_62 = arith.constant 0 : index
    %110 = vector.load %arg5[%c13, %c0_62] : memref<14x128xf32, #tpu.memory_space<vmem>>, vector<1x32xf32>
    %111 = vector.broadcast %110 : vector<1x32xf32> to vector<8x32xf32>
    %112 = arith.addf %109, %111 : vector<8x32xf32>
    %c0_63 = arith.constant 0 : index
    %c0_64 = arith.constant 0 : index
    %113 = vector.load %arg6[%c0_63, %c0_64] : memref<8x32xf32, #tpu.memory_space<vmem>>, vector<8x32xf32>
    tpu.vector_store %arg6[%c0_63, %c0_64], %112 {strides = array<i32>} : memref<8x32xf32, #tpu.memory_space<vmem>>, vector<8x32xf32>,
    return
  }
  func.func @transform_0(%arg0: i32) -> (i32, i32) {
    %c0_i32 = arith.constant 0 : i32
    %c0_i32_0 = arith.constant 0 : i32
    return %arg0, %c0_i32 : i32, i32
  }
  func.func @transform_1(%arg0: i32) -> (i32, i32) {
    %c0_i32 = arith.constant 0 : i32
    %c0_i32_0 = arith.constant 0 : i32
    %c0_i32_1 = arith.constant 0 : i32
    return %c0_i32, %c0_i32_0 : i32, i32
  }
  func.func @transform_2(%arg0: i32) -> (i32, i32, i32) {
    %c0_i32 = arith.constant 0 : i32
    %c0_i32_0 = arith.constant 0 : i32
    %c0_i32_1 = arith.constant 0 : i32
    %c0_i32_2 = arith.constant 0 : i32
    return %c0_i32, %c0_i32_0, %c0_i32_1 : i32, i32, i32
  }
  func.func @transform_3(%arg0: i32) -> (i32, i32) {
    %c0_i32 = arith.constant 0 : i32
    %c0_i32_0 = arith.constant 0 : i32
    %c0_i32_1 = arith.constant 0 : i32
    return %c0_i32, %c0_i32_0 : i32, i32
  }
  func.func @transform_4(%arg0: i32) -> (i32, i32) {
    %c0_i32 = arith.constant 0 : i32
    %c0_i32_0 = arith.constant 0 : i32
    %c0_i32_1 = arith.constant 0 : i32
    return %c0_i32, %c0_i32_0 : i32, i32
  }
  func.func @transform_5(%arg0: i32) -> (i32, i32) {
    %c0_i32 = arith.constant 0 : i32
    %c0_i32_0 = arith.constant 0 : i32
    return %arg0, %c0_i32 : i32, i32
  }
}

</mosaic_0001>

<llo_original>
// kernel: tpu_custom_call.1
$region0: #{tpu_custom_call.1}
  #allocation0 [shape = 'u32[]', space=smem, size = 0x4, offset = 0x4, fixed_abs, tag = 'smem constant byte address 0x4 - core index']
  #allocation1 [shape = 'u32[144,128]{1,0:T(1,128)}', space=vmem, size = 0x12000, scoped, tag = 'internal scratch']
  %s0 = inlined_call_operand.hbm [shape: f32[4,64], index: 0, kind: input, shape index: {}]
  %s1 = inlined_call_operand.hbm [shape: f32[8,64], index: 1, kind: input, shape index: {}]
  %s2 = inlined_call_operand.hbm [shape: f32[7,128,256], index: 2, kind: input, shape index: {}]
  %s3 = inlined_call_operand.hbm [shape: f32[128,128], index: 3, kind: input, shape index: {}]
  %s4 = inlined_call_operand.hbm [shape: f32[14,128], index: 4, kind: input, shape index: {}]
  %s5 = inlined_call_operand.hbm [shape: f32[4,32], index: 5, kind: output, shape index: {}]
  %s6 = sld [smem:[#allocation0]]
  $region50: #{tpu_custom_call.1} parent=0
    _
  %s8 = ssub.s32 1, %s6
  %s9 = scalar_select 0, %s8, %s6
  $region1: #{tpu_custom_call.1} parent=0
    #allocation2 [shape = 'u8[4096]{0}', space=vmem, size = 0x1000, scoped, tag = 'input window, operand 0, single buffered']
    #allocation3 [shape = 's32[1]{0}', space=sflag, size = 0x4, scoped, tag = 'scoped memory for tpu_custom_call.1']
    #allocation4 [shape = 's32[1]{0}', space=sflag, size = 0x4, scoped, tag = 'scoped memory for tpu_custom_call.1']
    #allocation5 [shape = 'u8[4096]{0}', space=vmem, size = 0x1000, scoped, tag = 'input window, operand 1, single buffered']
    #allocation6 [shape = 's32[1]{0}', space=sflag, size = 0x4, scoped, tag = 'scoped memory for tpu_custom_call.1']
    #allocation7 [shape = 'u8[917504]{0}', space=vmem, size = 0xe0000, scoped, tag = 'input window, operand 2, single buffered']
    #allocation8 [shape = 'u8[65536]{0}', space=vmem, size = 0x10000, scoped, tag = 'input window, operand 3, single buffered']
    #allocation9 [shape = 's32[1]{0}', space=sflag, size = 0x4, scoped, tag = 'scoped memory for tpu_custom_call.1']
    #allocation10 [shape = 'u8[8192]{0}', space=vmem, size = 0x2000, scoped, tag = 'input window, operand 4, single buffered']
    #allocation11 [shape = 'u8[4096]{0}', space=vmem, size = 0x1000, scoped, tag = 'output window, operand 0, single buffered']
    %10 = vsyncpa [#allocation3], 0
    %11 = vsyncpa [#allocation6], 0
    %12 = vsyncpa [#allocation9], 0
    %13 = vsyncpa [#allocation4], 0
    // Predicated region
    $region2: #{tpu_custom_call.1} parent=1 // pred_check
      _
    $region3: #{tpu_custom_call.1} parent=1 // pred_check_branch
      %15 = sbr.rel (0) target = $region5
    $region4: #{tpu_custom_call.1} parent=1 // pred_region
      %s17 = ssub.s32 128, 64
      %18 = vsyncadd [#allocation3], %s17
      %s19 = sshll.u32 [#allocation2], 4
      %s20 = int_to_ptr.vmem [resolvable:$true] %s19
      %25 = dma.hbm_to_vmem [thread:$0]  %s0, 64, %s20, [#allocation3], 64, 64, 4
    $region5: #{tpu_custom_call.1} parent=1 // pred_fallthru
      _
    // Predicated region
    $region6: #{tpu_custom_call.1} parent=1 // pred_check
      _
    $region7: #{tpu_custom_call.1} parent=1 // pred_check_branch
      %27 = sbr.rel (0) target = $region9
    $region8: #{tpu_custom_call.1} parent=1 // pred_region
      %s29 = ssub.s32 128, 128
      %30 = vsyncadd [#allocation6], %s29
      %s32 = sshll.u32 [#allocation5], 4
      %s33 = int_to_ptr.vmem [resolvable:$true] %s32
      %35 = dma.hbm_to_vmem [thread:$0]  %s1, 128, %s33, [#allocation6]
    $region9: #{tpu_custom_call.1} parent=1 // pred_fallthru
      _
    // Predicated region
    $region10: #{tpu_custom_call.1} parent=1 // pred_check
      _
    $region11: #{tpu_custom_call.1} parent=1 // pred_check_branch
      %37 = sbr.rel (0) target = $region13
    $region12: #{tpu_custom_call.1} parent=1 // pred_region
      %s39 = ssub.s32 28672, 28672
      %40 = vsyncadd [#allocation6], %s39
      %s41 = sshll.u32 [#allocation7], 4
      %s42 = int_to_ptr.vmem [resolvable:$true] %s41
      %47 = dma.hbm_to_vmem [thread:$0]  %s2, 28672, %s42, [#allocation6], 256, 256, 16
    $region13: #{tpu_custom_call.1} parent=1 // pred_fallthru
      _
    // Predicated region
    $region14: #{tpu_custom_call.1} parent=1 // pred_check
      _
    $region15: #{tpu_custom_call.1} parent=1 // pred_check_branch
      %49 = sbr.rel (0) target = $region17
    $region16: #{tpu_custom_call.1} parent=1 // pred_region
      %s51 = ssub.s32 2048, 2048
      %52 = vsyncadd [#allocation9], %s51
      %s53 = sshll.u32 [#allocation8], 4
      %s54 = int_to_ptr.vmem [resolvable:$true] %s53
      %59 = dma.hbm_to_vmem [thread:$0]  %s3, 2048, %s54, [#allocation9], 128, 128, 8
    $region17: #{tpu_custom_call.1} parent=1 // pred_fallthru
      _
    // Predicated region
    $region18: #{tpu_custom_call.1} parent=1 // pred_check
      _
    $region19: #{tpu_custom_call.1} parent=1 // pred_check_branch
      %61 = sbr.rel (0) target = $region21
    $region20: #{tpu_custom_call.1} parent=1 // pred_region
      %s63 = ssub.s32 256, 256
      %64 = vsyncadd [#allocation9], %s63
      %s65 = sshll.u32 [#allocation10], 4
      %s66 = int_to_ptr.vmem [resolvable:$true] %s65
      %71 = dma.hbm_to_vmem [thread:$0]  %s4, 256, %s66, [#allocation9], 128, 128, 8
    $region21: #{tpu_custom_call.1} parent=1 // pred_fallthru
      _
    // Predicated region
    $region22: #{tpu_custom_call.1} parent=1 // pred_check
      _
    $region23: #{tpu_custom_call.1} parent=1 // pred_check_branch
      %73 = sbr.rel (0) target = $region25
    $region24: #{tpu_custom_call.1} parent=1 // pred_region
      %74 = dma.done [#allocation3], 128
    $region25: #{tpu_custom_call.1} parent=1 // pred_fallthru
      _
    // Predicated region
    $region26: #{tpu_custom_call.1} parent=1 // pred_check
      _
    $region27: #{tpu_custom_call.1} parent=1 // pred_check_branch
      %76 = sbr.rel (0) target = $region29
    $region28: #{tpu_custom_call.1} parent=1 // pred_region
      %77 = dma.done [#allocation6], 128
    $region29: #{tpu_custom_call.1} parent=1 // pred_fallthru
      _
    // Predicated region
    $region30: #{tpu_custom_call.1} parent=1 // pred_check
      _
    $region31: #{tpu_custom_call.1} parent=1 // pred_check_branch
      %79 = sbr.rel (0) target = $region33
    $region32: #{tpu_custom_call.1} parent=1 // pred_region
      %80 = dma.done [#allocation6], 28672
    $region33: #{tpu_custom_call.1} parent=1 // pred_fallthru
      _
    // Predicated region
    $region34: #{tpu_custom_call.1} parent=1 // pred_check
      _
    $region35: #{tpu_custom_call.1} parent=1 // pred_check_branch
      %82 = sbr.rel (0) target = $region37
    $region36: #{tpu_custom_call.1} parent=1 // pred_region
      %83 = dma.done [#allocation9], 2048
    $region37: #{tpu_custom_call.1} parent=1 // pred_fallthru
      _
    // Predicated region
    $region38: #{tpu_custom_call.1} parent=1 // pred_check
      _
    $region39: #{tpu_custom_call.1} parent=1 // pred_check_branch
      %85 = sbr.rel (0) target = $region41
    $region40: #{tpu_custom_call.1} parent=1 // pred_region
      %86 = dma.done [#allocation9], 256
    $region41: #{tpu_custom_call.1} parent=1 // pred_fallthru
      _
    %v87 = vld [vmem:[#allocation8] sm:$0xff]
    %v88 = vld [vmem:[#allocation8 + $0x8] sm:$0xff]
    %v89 = vld [vmem:[#allocation8 + $0x10] sm:$0xff]
    %v90 = vld [vmem:[#allocation8 + $0x18] sm:$0xff]
    %v91 = vld [vmem:[#allocation8 + $0x20] sm:$0xff]
    %v92 = vld [vmem:[#allocation8 + $0x28] sm:$0xff]
    %v93 = vld [vmem:[#allocation8 + $0x30] sm:$0xff]
    %v94 = vld [vmem:[#allocation8 + $0x38] sm:$0xff]
    %v95 = vld [vmem:[#allocation8 + $0x40] sm:$0xff]
    %v96 = vld [vmem:[#allocation8 + $0x48] sm:$0xff]
    %v97 = vld [vmem:[#allocation8 + $0x50] sm:$0xff]
    %v98 = vld [vmem:[#allocation8 + $0x58] sm:$0xff]
    %v99 = vld [vmem:[#allocation8 + $0x60] sm:$0xff]
    %v100 = vld [vmem:[#allocation8 + $0x68] sm:$0xff]
    %v101 = vld [vmem:[#allocation8 + $0x70] sm:$0xff]
    %v102 = vld [vmem:[#allocation8 + $0x78] sm:$0xff]
    %v103 = vld [vmem:[#allocation2] sm:$0xff]
    %v104 = vld [vmem:[#allocation5] sm:$0xff]
    %v105 = vld [vmem:[#allocation7] sm:$0xff]
    %v106 = vld [vmem:[#allocation7 + $0x8] sm:$0xff]
    %v107 = vld [vmem:[#allocation7 + $0x10] sm:$0xff]
    %v108 = vld [vmem:[#allocation7 + $0x18] sm:$0xff]
    %v109 = vld [vmem:[#allocation7 + $0x20] sm:$0xff]
    %v110 = vld [vmem:[#allocation7 + $0x28] sm:$0xff]
    %v111 = vld [vmem:[#allocation7 + $0x30] sm:$0xff]
    %v112 = vld [vmem:[#allocation7 + $0x38] sm:$0xff]
    %v113 = vld [vmem:[#allocation7 + $0x40] sm:$0xff]
    %v114 = vld [vmem:[#allocation7 + $0x48] sm:$0xff]
    %v115 = vld [vmem:[#allocation7 + $0x50] sm:$0xff]
    %v116 = vld [vmem:[#allocation7 + $0x58] sm:$0xff]
    %v117 = vld [vmem:[#allocation7 + $0x60] sm:$0xff]
    %v118 = vld [vmem:[#allocation7 + $0x68] sm:$0xff]
    %v119 = vld [vmem:[#allocation7 + $0x70] sm:$0xff]
    %v120 = vld [vmem:[#allocation7 + $0x78] sm:$0xff]
    %vm121 = vcmask 523264
    %v123 = vsel %vm121, %v104, 0
    %125 = vmatprep.subr.mxu0 %v106
    %126 = vmatpush1.msra.mxu0 %v105
    %127 = vmatprep.subr.mxu0 %v108
    %128 = vmatpush1.msra.mxu0 %v107
    %129 = vmatprep.subr.mxu0 %v110
    %130 = vmatpush1.msra.mxu0 %v109
    %131 = vmatprep.subr.mxu0 %v112
    %132 = vmatpush1.msra.mxu0 %v111
    %133 = vmatprep.subr.mxu0 %v114
    %134 = vmatpush1.msra.mxu0 %v113
    %135 = vmatprep.subr.mxu0 %v116
    %136 = vmatpush1.msra.mxu0 %v115
    %137 = vmatprep.subr.mxu0 %v118
    %138 = vmatpush1.msra.mxu0 %v117
    %139 = vmatprep.subr.mxu0 %v120
    %140 = vmatpush1.msra.mxu0 %v119
    %141 = vmatprep.subr.mxu0 0.0
    %142 = vmatpush1.msra.mxu0 0.0
    %143 = vmatprep.subr.mxu0 0.0
    %144 = vmatpush1.msra.mxu0 0.0
    %145 = vmatprep.subr.mxu0 0.0
    %146 = vmatpush1.msra.mxu0 0.0
    %147 = vmatprep.subr.mxu0 0.0
    %148 = vmatpush1.msra.mxu0 0.0
    %149 = vmatprep.subr.mxu0 0.0
    %150 = vmatpush1.msra.mxu0 0.0
    %151 = vmatprep.subr.mxu0 0.0
    %152 = vmatpush1.msra.mxu0 0.0
    %153 = vmatprep.subr.mxu0 0.0
    %154 = vmatpush1.msra.mxu0 0.0
    %155 = vmatprep.subr.mxu0 0.0
    %156 = vmatpush1.msra.mxu0 0.0
    %157 = vmatprep.subr.mxu0 0.0
    %158 = vmatpush1.msra.mxu0 0.0
    %159 = vmatprep.subr.mxu0 0.0
    %160 = vmatpush1.msra.mxu0 0.0
    %161 = vmatprep.subr.mxu0 0.0
    %162 = vmatpush1.msra.mxu0 0.0
    %163 = vmatprep.subr.mxu0 0.0
    %164 = vmatpush1.msra.mxu0 0.0
    %165 = vmatprep.subr.mxu0 0.0
    %166 = vmatpush1.msra.mxu0 0.0
    %167 = vmatprep.subr.mxu0 0.0
    %168 = vmatpush1.msra.mxu0 0.0
    %169 = vmatprep.subr.mxu0 0.0
    %170 = vmatpush1.msra.mxu0 0.0
    %171 = vmatprep.subr.mxu0 0.0
    %172 = vmatpush1.msra.mxu0 0.0
    %173 = vmatprep.subr.mxu0 0.0
    %174 = vmatpush1.msra.mxu0 0.0
    %175 = vmatprep.subr.mxu0 0.0
    %176 = vmatpush1.msra.mxu0 0.0
    %177 = vmatprep.subr.mxu0 0.0
    %178 = vmatpush1.msra.mxu0 0.0
    %179 = vmatprep.subr.mxu0 0.0
    %180 = vmatpush1.msra.mxu0 0.0
    %181 = vmatprep.subr.mxu0 0.0
    %182 = vmatpush1.msra.mxu0 0.0
    %183 = vmatprep.subr.mxu0 0.0
    %184 = vmatpush1.msra.mxu0 0.0
    %185 = vmatprep.subr.mxu0 0.0
    %186 = vmatpush1.msra.mxu0 0.0
    %187 = vmatprep.subr.mxu0 0.0
    %188 = vmatpush1.msra.mxu0 0.0
    %189 = vmatprep.mubr.f32.mxu0 0.0
    %190 = vmatmul.mubr.f32.gmra.mrb[0].mxu0 %v123
    %v191 = vpop.f32.mrb[0].mxu0
    %v192 = vadd.f32 0.0, %v191
    %v193 = vpop.f32.mrb[0].mxu0
    %v194 = vadd.f32 0.0, %v193
    %195 = vdwg.mxu0
    %v196 = vld [vmem:[#allocation10] sm:$0x1]
    %v197 = vlaneseq
    %v198 = vshrl.u32 %v197, 7
    %v199 = vsub.s32 0, %v198
    %v200 = vrot.slane %v196, %v199
    %v201 = vadd.f32 %v192, %v200
    %v202 = vld [vmem:[#allocation10 + $0x1] sm:$0x1]
    %v203 = vld [vmem:[#allocation10 + $0x2] sm:$0x1]
    %204 = vmatprep.subr.mxu0 0.0
    %205 = vmatpush1.msra.mxu0 %v87
    %206 = vmatprep.subr.mxu0 0.0
    %207 = vmatpush1.msra.mxu0 %v88
    %208 = vmatprep.subr.mxu0 0.0
    %209 = vmatpush1.msra.mxu0 %v89
    %210 = vmatprep.subr.mxu0 0.0
    %211 = vmatpush1.msra.mxu0 %v90
    %212 = vmatprep.subr.mxu0 0.0
    %213 = vmatpush1.msra.mxu0 %v91
    %214 = vmatprep.subr.mxu0 0.0
    %215 = vmatpush1.msra.mxu0 %v92
    %216 = vmatprep.subr.mxu0 0.0
    %217 = vmatpush1.msra.mxu0 %v93
    %218 = vmatprep.subr.mxu0 0.0
    %219 = vmatpush1.msra.mxu0 %v94
    %220 = vmatprep.subr.mxu0 0.0
    %221 = vmatpush1.msra.mxu0 %v95
    %222 = vmatprep.subr.mxu0 0.0
    %223 = vmatpush1.msra.mxu0 %v96
    %224 = vmatprep.subr.mxu0 0.0
    %225 = vmatpush1.msra.mxu0 %v97
    %226 = vmatprep.subr.mxu0 0.0
    %227 = vmatpush1.msra.mxu0 %v98
    %228 = vmatprep.subr.mxu0 0.0
    %229 = vmatpush1.msra.mxu0 %v99
    %230 = vmatprep.subr.mxu0 0.0
    %231 = vmatpush1.msra.mxu0 %v100
    %232 = vmatprep.subr.mxu0 0.0
    %233 = vmatpush1.msra.mxu0 %v101
    %234 = vmatprep.subr.mxu0 0.0
    %235 = vmatpush1.msra.mxu0 %v102
    %236 = vmatprep.subr.mxu0 0.0
    %237 = vmatpush1.msra.mxu0 0.0
    %238 = vmatprep.subr.mxu0 0.0
    %239 = vmatpush1.msra.mxu0 0.0
    %240 = vmatprep.subr.mxu0 0.0
    %241 = vmatpush1.msra.mxu0 0.0
    %242 = vmatprep.subr.mxu0 0.0
    %243 = vmatpush1.msra.mxu0 0.0
    %244 = vmatprep.subr.mxu0 0.0
    %245 = vmatpush1.msra.mxu0 0.0
    %246 = vmatprep.subr.mxu0 0.0
    %247 = vmatpush1.msra.mxu0 0.0
    %248 = vmatprep.subr.mxu0 0.0
    %249 = vmatpush1.msra.mxu0 0.0
    %250 = vmatprep.subr.mxu0 0.0
    %251 = vmatpush1.msra.mxu0 0.0
    %252 = vmatprep.subr.mxu0 0.0
    %253 = vmatpush1.msra.mxu0 0.0
    %254 = vmatprep.subr.mxu0 0.0
    %255 = vmatpush1.msra.mxu0 0.0
    %256 = vmatprep.subr.mxu0 0.0
    %257 = vmatpush1.msra.mxu0 0.0
    %258 = vmatprep.subr.mxu0 0.0
    %259 = vmatpush1.msra.mxu0 0.0
    %260 = vmatprep.subr.mxu0 0.0
    %261 = vmatpush1.msra.mxu0 0.0
    %262 = vmatprep.subr.mxu0 0.0
    %263 = vmatpush1.msra.mxu0 0.0
    %264 = vmatprep.subr.mxu0 0.0
    %265 = vmatpush1.msra.mxu0 0.0
    %266 = vmatprep.subr.mxu0 0.0
    %267 = vmatpush1.msra.mxu0 0.0
    %268 = vmatprep.mubr.f32.mxu0 0.0
    %269 = vmatmul.mubr.f32.gmra.mrb[0].mxu0 %v201
    %v270 = vpop.f32.mrb[0].mxu0
    %v271 = vadd.f32 0.0, %v270
    %v272 = vpop.f32.mrb[0].mxu0
    %273 = vdwg.mxu0
    %v274 = vsub.f32 %v201, %v271
    %v275 = vmul.f32 %v274, %v274
    %276 = vmatprep.subr.mxu0 0.0
    %277 = vmatpush1.msra.mxu0 %v87
    %278 = vmatprep.subr.mxu0 0.0
    %279 = vmatpush1.msra.mxu0 %v88
    %280 = vmatprep.subr.mxu0 0.0
    %281 = vmatpush1.msra.mxu0 %v89
    %282 = vmatprep.subr.mxu0 0.0
    %283 = vmatpush1.msra.mxu0 %v90
    %284 = vmatprep.subr.mxu0 0.0
    %285 = vmatpush1.msra.mxu0 %v91
    %286 = vmatprep.subr.mxu0 0.0
    %287 = vmatpush1.msra.mxu0 %v92
    %288 = vmatprep.subr.mxu0 0.0
    %289 = vmatpush1.msra.mxu0 %v93
    %290 = vmatprep.subr.mxu0 0.0
    %291 = vmatpush1.msra.mxu0 %v94
    %292 = vmatprep.subr.mxu0 0.0
    %293 = vmatpush1.msra.mxu0 %v95
    %294 = vmatprep.subr.mxu0 0.0
    %295 = vmatpush1.msra.mxu0 %v96
    %296 = vmatprep.subr.mxu0 0.0
    %297 = vmatpush1.msra.mxu0 %v97
    %298 = vmatprep.subr.mxu0 0.0
    %299 = vmatpush1.msra.mxu0 %v98
    %300 = vmatprep.subr.mxu0 0.0
    %301 = vmatpush1.msra.mxu0 %v99
    %302 = vmatprep.subr.mxu0 0.0
    %303 = vmatpush1.msra.mxu0 %v100
    %304 = vmatprep.subr.mxu0 0.0
    %305 = vmatpush1.msra.mxu0 %v101
    %306 = vmatprep.subr.mxu0 0.0
    %307 = vmatpush1.msra.mxu0 %v102
    %308 = vmatprep.subr.mxu0 0.0
    %309 = vmatpush1.msra.mxu0 0.0
    %310 = vmatprep.subr.mxu0 0.0
    %311 = vmatpush1.msra.mxu0 0.0
    %312 = vmatprep.subr.mxu0 0.0
    %313 = vmatpush1.msra.mxu0 0.0
    %314 = vmatprep.subr.mxu0 0.0
    %315 = vmatpush1.msra.mxu0 0.0
    %316 = vmatprep.subr.mxu0 0.0
    %317 = vmatpush1.msra.mxu0 0.0
    %318 = vmatprep.subr.mxu0 0.0
    %319 = vmatpush1.msra.mxu0 0.0
    %320 = vmatprep.subr.mxu0 0.0
    %321 = vmatpush1.msra.mxu0 0.0
    %322 = vmatprep.subr.mxu0 0.0
    %323 = vmatpush1.msra.mxu0 0.0
    %324 = vmatprep.subr.mxu0 0.0
    %325 = vmatpush1.msra.mxu0 0.0
    %326 = vmatprep.subr.mxu0 0.0
    %327 = vmatpush1.msra.mxu0 0.0
    %328 = vmatprep.subr.mxu0 0.0
    %329 = vmatpush1.msra.mxu0 0.0
    %330 = vmatprep.subr.mxu0 0.0
    %331 = vmatpush1.msra.mxu0 0.0
    %332 = vmatprep.subr.mxu0 0.0
    %333 = vmatpush1.msra.mxu0 0.0
    %334 = vmatprep.subr.mxu0 0.0
    %335 = vmatpush1.msra.mxu0 0.0
    %336 = vmatprep.subr.mxu0 0.0
    %337 = vmatpush1.msra.mxu0 0.0
    %338 = vmatprep.subr.mxu0 0.0
    %339 = vmatpush1.msra.mxu0 0.0
    %340 = vmatprep.mubr.f32.mxu0 0.0
    %341 = vmatmul.mubr.f32.gmra.mrb[0].mxu0 %v275
    %v342 = vpop.f32.mrb[0].mxu0
    %v343 = vadd.f32 1e-05, %v342
    %v344 = vpop.f32.mrb[0].mxu0
    %345 = vdwg.mxu0
    %v346 = vrsqrt.pop %v343
    %v347 = vmul.f32 %v274, %v346
    %v348 = vlaneseq
    %v349 = vshrl.u32 %v348, 7
    %v350 = vsub.s32 0, %v349
    %v351 = vrot.slane %v202, %v350
    %v352 = vmul.f32 %v347, %v351
    %v353 = vlaneseq
    %v354 = vshrl.u32 %v353, 7
    %v355 = vsub.s32 0, %v354
    %v356 = vrot.slane %v203, %v355
    %v357 = vadd.f32 %v352, %v356
    %v358 = vmax.f32 %v357, 0.0
    %s359 = scalar_lea.vmem [#allocation7], 256
    %v360 = vld [vmem:[%s359] sm:$0xff]
    %v361 = vld [vmem:[%s359 + $0x10] sm:$0xff]
    %v362 = vld [vmem:[%s359 + $0x20] sm:$0xff]
    %v363 = vld [vmem:[%s359 + $0x30] sm:$0xff]
    %v364 = vld [vmem:[%s359 + $0x40] sm:$0xff]
    %v365 = vld [vmem:[%s359 + $0x50] sm:$0xff]
    %v366 = vld [vmem:[%s359 + $0x60] sm:$0xff]
    %v367 = vld [vmem:[%s359 + $0x70] sm:$0xff]
    %v368 = vld [vmem:[%s359 + $0x80] sm:$0xff]
    %v369 = vld [vmem:[%s359 + $0x90] sm:$0xff]
    %v370 = vld [vmem:[%s359 + $0xa0] sm:$0xff]
    %v371 = vld [vmem:[%s359 + $0xb0] sm:$0xff]
    %v372 = vld [vmem:[%s359 + $0xc0] sm:$0xff]
    %v373 = vld [vmem:[%s359 + $0xd0] sm:$0xff]
    %v374 = vld [vmem:[%s359 + $0xe0] sm:$0xff]
    %v375 = vld [vmem:[%s359 + $0xf0] sm:$0xff]
    %v376 = vld [vmem:[#allocation10 + $0x3] sm:$0x1]
    %v377 = vlaneseq
    %v378 = vshrl.u32 %v377, 7
    %v379 = vsub.s32 0, %v378
    %v380 = vrot.slane %v376, %v379
    %381 = vmatprep.subr.mxu0 0.0
    %382 = vmatpush1.msra.mxu0 %v360
    %383 = vmatprep.subr.mxu0 0.0
    %384 = vmatpush1.msra.mxu0 %v361
    %385 = vmatprep.subr.mxu0 0.0
    %386 = vmatpush1.msra.mxu0 %v362
    %387 = vmatprep.subr.mxu0 0.0
    %388 = vmatpush1.msra.mxu0 %v363
    %389 = vmatprep.subr.mxu0 0.0
    %390 = vmatpush1.msra.mxu0 %v364
    %391 = vmatprep.subr.mxu0 0.0
    %392 = vmatpush1.msra.mxu0 %v365
    %393 = vmatprep.subr.mxu0 0.0
    %394 = vmatpush1.msra.mxu0 %v366
    %395 = vmatprep.subr.mxu0 0.0
    %396 = vmatpush1.msra.mxu0 %v367
    %397 = vmatprep.subr.mxu0 0.0
    %398 = vmatpush1.msra.mxu0 %v368
    %399 = vmatprep.subr.mxu0 0.0
    %400 = vmatpush1.msra.mxu0 %v369
    %401 = vmatprep.subr.mxu0 0.0
    %402 = vmatpush1.msra.mxu0 %v370
    %403 = vmatprep.subr.mxu0 0.0
    %404 = vmatpush1.msra.mxu0 %v371
    %405 = vmatprep.subr.mxu0 0.0
    %406 = vmatpush1.msra.mxu0 %v372
    %407 = vmatprep.subr.mxu0 0.0
    %408 = vmatpush1.msra.mxu0 %v373
    %409 = vmatprep.subr.mxu0 0.0
    %410 = vmatpush1.msra.mxu0 %v374
    %411 = vmatprep.subr.mxu0 0.0
    %412 = vmatpush1.msra.mxu0 %v375
    %413 = vmatprep.subr.mxu0 0.0
    %414 = vmatpush1.msra.mxu0 0.0
    %415 = vmatprep.subr.mxu0 0.0
    %416 = vmatpush1.msra.mxu0 0.0
    %417 = vmatprep.subr.mxu0 0.0
    %418 = vmatpush1.msra.mxu0 0.0
    %419 = vmatprep.subr.mxu0 0.0
    %420 = vmatpush1.msra.mxu0 0.0
    %421 = vmatprep.subr.mxu0 0.0
    %422 = vmatpush1.msra.mxu0 0.0
    %423 = vmatprep.subr.mxu0 0.0
    %424 = vmatpush1.msra.mxu0 0.0
    %425 = vmatprep.subr.mxu0 0.0
    %426 = vmatpush1.msra.mxu0 0.0
    %427 = vmatprep.subr.mxu0 0.0
    %428 = vmatpush1.msra.mxu0 0.0
    %429 = vmatprep.subr.mxu0 0.0
    %430 = vmatpush1.msra.mxu0 0.0
    %431 = vmatprep.subr.mxu0 0.0
    %432 = vmatpush1.msra.mxu0 0.0
    %433 = vmatprep.subr.mxu0 0.0
    %434 = vmatpush1.msra.mxu0 0.0
    %435 = vmatprep.subr.mxu0 0.0
    %436 = vmatpush1.msra.mxu0 0.0
    %437 = vmatprep.subr.mxu0 0.0
    %438 = vmatpush1.msra.mxu0 0.0
    %439 = vmatprep.subr.mxu0 0.0
    %440 = vmatpush1.msra.mxu0 0.0
    %441 = vmatprep.subr.mxu0 0.0
    %442 = vmatpush1.msra.mxu0 0.0
    %443 = vmatprep.subr.mxu0 0.0
    %444 = vmatpush1.msra.mxu0 0.0
    %445 = vmatprep.mubr.f32.mxu0 0.0
    %446 = vmatmul.mubr.f32.gmra.mrb[0].mxu0 %v358
    %v447 = vpop.f32.mrb[0].mxu0
    %v448 = vadd.f32 %v380, %v447
    %v449 = vpop.f32.mrb[0].mxu0
    %450 = vdwg.mxu0
    %v451 = vld [vmem:[#allocation10 + $0x4] sm:$0x1]
    %v452 = vld [vmem:[#allocation10 + $0x5] sm:$0x1]
    %453 = vmatprep.subr.mxu0 0.0
    %454 = vmatpush1.msra.mxu0 %v87
    %455 = vmatprep.subr.mxu0 0.0
    %456 = vmatpush1.msra.mxu0 %v88
    %457 = vmatprep.subr.mxu0 0.0
    %458 = vmatpush1.msra.mxu0 %v89
    %459 = vmatprep.subr.mxu0 0.0
    %460 = vmatpush1.msra.mxu0 %v90
    %461 = vmatprep.subr.mxu0 0.0
    %462 = vmatpush1.msra.mxu0 %v91
    %463 = vmatprep.subr.mxu0 0.0
    %464 = vmatpush1.msra.mxu0 %v92
    %465 = vmatprep.subr.mxu0 0.0
    %466 = vmatpush1.msra.mxu0 %v93
    %467 = vmatprep.subr.mxu0 0.0
    %468 = vmatpush1.msra.mxu0 %v94
    %469 = vmatprep.subr.mxu0 0.0
    %470 = vmatpush1.msra.mxu0 %v95
    %471 = vmatprep.subr.mxu0 0.0
    %472 = vmatpush1.msra.mxu0 %v96
    %473 = vmatprep.subr.mxu0 0.0
    %474 = vmatpush1.msra.mxu0 %v97
    %475 = vmatprep.subr.mxu0 0.0
    %476 = vmatpush1.msra.mxu0 %v98
    %477 = vmatprep.subr.mxu0 0.0
    %478 = vmatpush1.msra.mxu0 %v99
    %479 = vmatprep.subr.mxu0 0.0
    %480 = vmatpush1.msra.mxu0 %v100
    %481 = vmatprep.subr.mxu0 0.0
    %482 = vmatpush1.msra.mxu0 %v101
    %483 = vmatprep.subr.mxu0 0.0
    %484 = vmatpush1.msra.mxu0 %v102
    %485 = vmatprep.subr.mxu0 0.0
    %486 = vmatpush1.msra.mxu0 0.0
    %487 = vmatprep.subr.mxu0 0.0
    %488 = vmatpush1.msra.mxu0 0.0
    %489 = vmatprep.subr.mxu0 0.0
    %490 = vmatpush1.msra.mxu0 0.0
    %491 = vmatprep.subr.mxu0 0.0
    %492 = vmatpush1.msra.mxu0 0.0
    %493 = vmatprep.subr.mxu0 0.0
    %494 = vmatpush1.msra.mxu0 0.0
    %495 = vmatprep.subr.mxu0 0.0
    %496 = vmatpush1.msra.mxu0 0.0
    %497 = vmatprep.subr.mxu0 0.0
    %498 = vmatpush1.msra.mxu0 0.0
    %499 = vmatprep.subr.mxu0 0.0
    %500 = vmatpush1.msra.mxu0 0.0
    %501 = vmatprep.subr.mxu0 0.0
    %502 = vmatpush1.msra.mxu0 0.0
    %503 = vmatprep.subr.mxu0 0.0
    %504 = vmatpush1.msra.mxu0 0.0
    %505 = vmatprep.subr.mxu0 0.0
    %506 = vmatpush1.msra.mxu0 0.0
    %507 = vmatprep.subr.mxu0 0.0
    %508 = vmatpush1.msra.mxu0 0.0
    %509 = vmatprep.subr.mxu0 0.0
    %510 = vmatpush1.msra.mxu0 0.0
    %511 = vmatprep.subr.mxu0 0.0
    %512 = vmatpush1.msra.mxu0 0.0
    %513 = vmatprep.subr.mxu0 0.0
    %514 = vmatpush1.msra.mxu0 0.0
    %515 = vmatprep.subr.mxu0 0.0
    %516 = vmatpush1.msra.mxu0 0.0
    %517 = vmatprep.mubr.f32.mxu0 0.0
    %518 = vmatmul.mubr.f32.gmra.mrb[0].mxu0 %v448
    %v519 = vpop.f32.mrb[0].mxu0
    %v520 = vadd.f32 0.0, %v519
    %v521 = vpop.f32.mrb[0].mxu0
    %522 = vdwg.mxu0
    %v523 = vsub.f32 %v448, %v520
    %v524 = vmul.f32 %v523, %v523
    %525 = vmatprep.subr.mxu0 0.0
    %526 = vmatpush1.msra.mxu0 %v87
    %527 = vmatprep.subr.mxu0 0.0
    %528 = vmatpush1.msra.mxu0 %v88
    %529 = vmatprep.subr.mxu0 0.0
    %530 = vmatpush1.msra.mxu0 %v89
    %531 = vmatprep.subr.mxu0 0.0
    %532 = vmatpush1.msra.mxu0 %v90
    %533 = vmatprep.subr.mxu0 0.0
    %534 = vmatpush1.msra.mxu0 %v91
    %535 = vmatprep.subr.mxu0 0.0
    %536 = vmatpush1.msra.mxu0 %v92
    %537 = vmatprep.subr.mxu0 0.0
    %538 = vmatpush1.msra.mxu0 %v93
    %539 = vmatprep.subr.mxu0 0.0
    %540 = vmatpush1.msra.mxu0 %v94
    %541 = vmatprep.subr.mxu0 0.0
    %542 = vmatpush1.msra.mxu0 %v95
    %543 = vmatprep.subr.mxu0 0.0
    %544 = vmatpush1.msra.mxu0 %v96
    %545 = vmatprep.subr.mxu0 0.0
    %546 = vmatpush1.msra.mxu0 %v97
    %547 = vmatprep.subr.mxu0 0.0
    %548 = vmatpush1.msra.mxu0 %v98
    %549 = vmatprep.subr.mxu0 0.0
    %550 = vmatpush1.msra.mxu0 %v99
    %551 = vmatprep.subr.mxu0 0.0
    %552 = vmatpush1.msra.mxu0 %v100
    %553 = vmatprep.subr.mxu0 0.0
    %554 = vmatpush1.msra.mxu0 %v101
    %555 = vmatprep.subr.mxu0 0.0
    %556 = vmatpush1.msra.mxu0 %v102
    %557 = vmatprep.subr.mxu0 0.0
    %558 = vmatpush1.msra.mxu0 0.0
    %559 = vmatprep.subr.mxu0 0.0
    %560 = vmatpush1.msra.mxu0 0.0
    %561 = vmatprep.subr.mxu0 0.0
    %562 = vmatpush1.msra.mxu0 0.0
    %563 = vmatprep.subr.mxu0 0.0
    %564 = vmatpush1.msra.mxu0 0.0
    %565 = vmatprep.subr.mxu0 0.0
    %566 = vmatpush1.msra.mxu0 0.0
    %567 = vmatprep.subr.mxu0 0.0
    %568 = vmatpush1.msra.mxu0 0.0
    %569 = vmatprep.subr.mxu0 0.0
    %570 = vmatpush1.msra.mxu0 0.0
    %571 = vmatprep.subr.mxu0 0.0
    %572 = vmatpush1.msra.mxu0 0.0
    %573 = vmatprep.subr.mxu0 0.0
    %574 = vmatpush1.msra.mxu0 0.0
    %575 = vmatprep.subr.mxu0 0.0
    %576 = vmatpush1.msra.mxu0 0.0
    %577 = vmatprep.subr.mxu0 0.0
    %578 = vmatpush1.msra.mxu0 0.0
    %579 = vmatprep.subr.mxu0 0.0
    %580 = vmatpush1.msra.mxu0 0.0
    %581 = vmatprep.subr.mxu0 0.0
    %582 = vmatpush1.msra.mxu0 0.0
    %583 = vmatprep.subr.mxu0 0.0
    %584 = vmatpush1.msra.mxu0 0.0
    %585 = vmatprep.subr.mxu0 0.0
    %586 = vmatpush1.msra.mxu0 0.0
    %587 = vmatprep.subr.mxu0 0.0
    %588 = vmatpush1.msra.mxu0 0.0
    %589 = vmatprep.mubr.f32.mxu0 0.0
    %590 = vmatmul.mubr.f32.gmra.mrb[0].mxu0 %v524
    %v591 = vpop.f32.mrb[0].mxu0
    %v592 = vadd.f32 1e-05, %v591
    %v593 = vpop.f32.mrb[0].mxu0
    %594 = vdwg.mxu0
    %v595 = vrsqrt.pop %v592
    %v596 = vmul.f32 %v523, %v595
    %v597 = vlaneseq
    %v598 = vshrl.u32 %v597, 7
    %v599 = vsub.s32 0, %v598
    %v600 = vrot.slane %v451, %v599
    %v601 = vmul.f32 %v596, %v600
    %v602 = vlaneseq
    %v603 = vshrl.u32 %v602, 7
    %v604 = vsub.s32 0, %v603
    %v605 = vrot.slane %v452, %v604
    %v606 = vadd.f32 %v601, %v605
    %v607 = vmax.f32 %v606, 0.0
    %s608 = scalar_lea.vmem [#allocation7], 512
    %v609 = vld [vmem:[%s608] sm:$0xff]
    %v610 = vld [vmem:[%s608 + $0x10] sm:$0xff]
    %v611 = vld [vmem:[%s608 + $0x20] sm:$0xff]
    %v612 = vld [vmem:[%s608 + $0x30] sm:$0xff]
    %v613 = vld [vmem:[%s608 + $0x40] sm:$0xff]
    %v614 = vld [vmem:[%s608 + $0x50] sm:$0xff]
    %v615 = vld [vmem:[%s608 + $0x60] sm:$0xff]
    %v616 = vld [vmem:[%s608 + $0x70] sm:$0xff]
    %v617 = vld [vmem:[%s608 + $0x80] sm:$0xff]
    %v618 = vld [vmem:[%s608 + $0x90] sm:$0xff]
    %v619 = vld [vmem:[%s608 + $0xa0] sm:$0xff]
    %v620 = vld [vmem:[%s608 + $0xb0] sm:$0xff]
    %v621 = vld [vmem:[%s608 + $0xc0] sm:$0xff]
    %v622 = vld [vmem:[%s608 + $0xd0] sm:$0xff]
    %v623 = vld [vmem:[%s608 + $0xe0] sm:$0xff]
    %v624 = vld [vmem:[%s608 + $0xf0] sm:$0xff]
    %625 = vmatprep.subr.mxu0 0.0
    %626 = vmatpush1.msra.mxu0 %v609
    %627 = vmatprep.subr.mxu0 0.0
    %628 = vmatpush1.msra.mxu0 %v610
    %629 = vmatprep.subr.mxu0 0.0
    %630 = vmatpush1.msra.mxu0 %v611
    %631 = vmatprep.subr.mxu0 0.0
    %632 = vmatpush1.msra.mxu0 %v612
    %633 = vmatprep.subr.mxu0 0.0
    %634 = vmatpush1.msra.mxu0 %v613
    %635 = vmatprep.subr.mxu0 0.0
    %636 = vmatpush1.msra.mxu0 %v614
    %637 = vmatprep.subr.mxu0 0.0
    %638 = vmatpush1.msra.mxu0 %v615
    %639 = vmatprep.subr.mxu0 0.0
    %640 = vmatpush1.msra.mxu0 %v616
    %641 = vmatprep.subr.mxu0 0.0
    %642 = vmatpush1.msra.mxu0 %v617
    %643 = vmatprep.subr.mxu0 0.0
    %644 = vmatpush1.msra.mxu0 %v618
    %645 = vmatprep.subr.mxu0 0.0
    %646 = vmatpush1.msra.mxu0 %v619
    %647 = vmatprep.subr.mxu0 0.0
    %648 = vmatpush1.msra.mxu0 %v620
    %649 = vmatprep.subr.mxu0 0.0
    %650 = vmatpush1.msra.mxu0 %v621
    %651 = vmatprep.subr.mxu0 0.0
    %652 = vmatpush1.msra.mxu0 %v622
    %653 = vmatprep.subr.mxu0 0.0
    %654 = vmatpush1.msra.mxu0 %v623
    %655 = vmatprep.subr.mxu0 0.0
    %656 = vmatpush1.msra.mxu0 %v624
    %657 = vmatprep.subr.mxu0 0.0
    %658 = vmatpush1.msra.mxu0 0.0
    %659 = vmatprep.subr.mxu0 0.0
    %660 = vmatpush1.msra.mxu0 0.0
    %661 = vmatprep.subr.mxu0 0.0
    %662 = vmatpush1.msra.mxu0 0.0
    %663 = vmatprep.subr.mxu0 0.0
    %664 = vmatpush1.msra.mxu0 0.0
    %665 = vmatprep.subr.mxu0 0.0
    %666 = vmatpush1.msra.mxu0 0.0
    %667 = vmatprep.subr.mxu0 0.0
    %668 = vmatpush1.msra.mxu0 0.0
    %669 = vmatprep.subr.mxu0 0.0
    %670 = vmatpush1.msra.mxu0 0.0
    %671 = vmatprep.subr.mxu0 0.0
    %672 = vmatpush1.msra.mxu0 0.0
    %673 = vmatprep.subr.mxu0 0.0
    %674 = vmatpush1.msra.mxu0 0.0
    %675 = vmatprep.subr.mxu0 0.0
    %676 = vmatpush1.msra.mxu0 0.0
    %677 = vmatprep.subr.mxu0 0.0
    %678 = vmatpush1.msra.mxu0 0.0
    %679 = vmatprep.subr.mxu0 0.0
    %680 = vmatpush1.msra.mxu0 0.0
    %681 = vmatprep.subr.mxu0 0.0
    %682 = vmatpush1.msra.mxu0 0.0
    %683 = vmatprep.subr.mxu0 0.0
    %684 = vmatpush1.msra.mxu0 0.0
    %685 = vmatprep.subr.mxu0 0.0
    %686 = vmatpush1.msra.mxu0 0.0
    %687 = vmatprep.subr.mxu0 0.0
    %688 = vmatpush1.msra.mxu0 0.0
    %689 = vmatprep.mubr.f32.mxu0 0.0
    %690 = vmatmul.mubr.f32.gmra.mrb[0].mxu0 %v607
    %v691 = vpop.f32.mrb[0].mxu0
    %v692 = vadd.f32 %v194, %v691
    %v693 = vpop.f32.mrb[0].mxu0
    %694 = vdwg.mxu0
    %v695 = vld [vmem:[#allocation10 + $0x6] sm:$0x1]
    %v696 = vlaneseq
    %v697 = vshrl.u32 %v696, 7
    %v698 = vsub.s32 0, %v697
    %v699 = vrot.slane %v695, %v698
    %v700 = vadd.f32 %v692, %v699
    %s701 = scalar_lea.vmem [#allocation7], 768
    %v702 = vld [vmem:[%s701] sm:$0xff]
    %v703 = vld [vmem:[%s701 + $0x8] sm:$0xff]
    %v704 = vld [vmem:[%s701 + $0x10] sm:$0xff]
    %v705 = vld [vmem:[%s701 + $0x18] sm:$0xff]
    %v706 = vld [vmem:[%s701 + $0x20] sm:$0xff]
    %v707 = vld [vmem:[%s701 + $0x28] sm:$0xff]
    %v708 = vld [vmem:[%s701 + $0x30] sm:$0xff]
    %v709 = vld [vmem:[%s701 + $0x38] sm:$0xff]
    %v710 = vld [vmem:[%s701 + $0x40] sm:$0xff]
    %v711 = vld [vmem:[%s701 + $0x48] sm:$0xff]
    %v712 = vld [vmem:[%s701 + $0x50] sm:$0xff]
    %v713 = vld [vmem:[%s701 + $0x58] sm:$0xff]
    %v714 = vld [vmem:[%s701 + $0x60] sm:$0xff]
    %v715 = vld [vmem:[%s701 + $0x68] sm:$0xff]
    %v716 = vld [vmem:[%s701 + $0x70] sm:$0xff]
    %v717 = vld [vmem:[%s701 + $0x78] sm:$0xff]
    %s718 = scalar_lea.vmem [#allocation7], 1024
    %v719 = vld [vmem:[%s718] sm:$0xff]
    %v720 = vld [vmem:[%s718 + $0x8] sm:$0xff]
    %v721 = vld [vmem:[%s718 + $0x10] sm:$0xff]
    %v722 = vld [vmem:[%s718 + $0x18] sm:$0xff]
    %v723 = vld [vmem:[%s718 + $0x20] sm:$0xff]
    %v724 = vld [vmem:[%s718 + $0x28] sm:$0xff]
    %v725 = vld [vmem:[%s718 + $0x30] sm:$0xff]
    %v726 = vld [vmem:[%s718 + $0x38] sm:$0xff]
    %v727 = vld [vmem:[%s718 + $0x40] sm:$0xff]
    %v728 = vld [vmem:[%s718 + $0x48] sm:$0xff]
    %v729 = vld [vmem:[%s718 + $0x50] sm:$0xff]
    %v730 = vld [vmem:[%s718 + $0x58] sm:$0xff]
    %v731 = vld [vmem:[%s718 + $0x60] sm:$0xff]
    %v732 = vld [vmem:[%s718 + $0x68] sm:$0xff]
    %v733 = vld [vmem:[%s718 + $0x70] sm:$0xff]
    %v734 = vld [vmem:[%s718 + $0x78] sm:$0xff]
    %v736 = vsel %vm121, %v700, 0
    %738 = vmatprep.subr.mxu0 %v720
    %739 = vmatpush1.msra.mxu0 %v719
    %740 = vmatprep.subr.mxu0 %v722
    %741 = vmatpush1.msra.mxu0 %v721
    %742 = vmatprep.subr.mxu0 %v724
    %743 = vmatpush1.msra.mxu0 %v723
    %744 = vmatprep.subr.mxu0 %v726
    %745 = vmatpush1.msra.mxu0 %v725
    %746 = vmatprep.subr.mxu0 %v728
    %747 = vmatpush1.msra.mxu0 %v727
    %748 = vmatprep.subr.mxu0 %v730
    %749 = vmatpush1.msra.mxu0 %v729
    %750 = vmatprep.subr.mxu0 %v732
    %751 = vmatpush1.msra.mxu0 %v731
    %752 = vmatprep.subr.mxu0 %v734
    %753 = vmatpush1.msra.mxu0 %v733
    %754 = vmatprep.subr.mxu0 0.0
    %755 = vmatpush1.msra.mxu0 0.0
    %756 = vmatprep.subr.mxu0 0.0
    %757 = vmatpush1.msra.mxu0 0.0
    %758 = vmatprep.subr.mxu0 0.0
    %759 = vmatpush1.msra.mxu0 0.0
    %760 = vmatprep.subr.mxu0 0.0
    %761 = vmatpush1.msra.mxu0 0.0
    %762 = vmatprep.subr.mxu0 0.0
    %763 = vmatpush1.msra.mxu0 0.0
    %764 = vmatprep.subr.mxu0 0.0
    %765 = vmatpush1.msra.mxu0 0.0
    %766 = vmatprep.subr.mxu0 0.0
    %767 = vmatpush1.msra.mxu0 0.0
    %768 = vmatprep.subr.mxu0 0.0
    %769 = vmatpush1.msra.mxu0 0.0
    %770 = vmatprep.subr.mxu0 0.0
    %771 = vmatpush1.msra.mxu0 0.0
    %772 = vmatprep.subr.mxu0 0.0
    %773 = vmatpush1.msra.mxu0 0.0
    %774 = vmatprep.subr.mxu0 0.0
    %775 = vmatpush1.msra.mxu0 0.0
    %776 = vmatprep.subr.mxu0 0.0
    %777 = vmatpush1.msra.mxu0 0.0
    %778 = vmatprep.subr.mxu0 0.0
    %779 = vmatpush1.msra.mxu0 0.0
    %780 = vmatprep.subr.mxu0 0.0
    %781 = vmatpush1.msra.mxu0 0.0
    %782 = vmatprep.subr.mxu0 0.0
    %783 = vmatpush1.msra.mxu0 0.0
    %784 = vmatprep.subr.mxu0 0.0
    %785 = vmatpush1.msra.mxu0 0.0
    %786 = vmatprep.subr.mxu0 0.0
    %787 = vmatpush1.msra.mxu0 0.0
    %788 = vmatprep.subr.mxu0 0.0
    %789 = vmatpush1.msra.mxu0 0.0
    %790 = vmatprep.subr.mxu0 0.0
    %791 = vmatpush1.msra.mxu0 0.0
    %792 = vmatprep.subr.mxu0 0.0
    %793 = vmatpush1.msra.mxu0 0.0
    %794 = vmatprep.subr.mxu0 0.0
    %795 = vmatpush1.msra.mxu0 0.0
    %796 = vmatprep.subr.mxu0 0.0
    %797 = vmatpush1.msra.mxu0 0.0
    %798 = vmatprep.subr.mxu0 0.0
    %799 = vmatpush1.msra.mxu0 0.0
    %800 = vmatprep.subr.mxu0 0.0
    %801 = vmatpush1.msra.mxu0 0.0
    %802 = vmatprep.mubr.f32.mxu0 0.0
    %803 = vmatmul.mubr.f32.gmra.mrb[0].mxu0 %v736
    %v804 = vpop.f32.mrb[0].mxu0
    %v805 = vadd.f32 0.0, %v804
    %v806 = vpop.f32.mrb[0].mxu0
    %v807 = vadd.f32 0.0, %v806
    %808 = vdwg.mxu0
    %v810 = vsel %vm121, %v103, 0
    %812 = vmatprep.subr.mxu0 %v703
    %813 = vmatpush1.msra.mxu0 %v702
    %814 = vmatprep.subr.mxu0 %v705
    %815 = vmatpush1.msra.mxu0 %v704
    %816 = vmatprep.subr.mxu0 %v707
    %817 = vmatpush1.msra.mxu0 %v706
    %818 = vmatprep.subr.mxu0 %v709
    %819 = vmatpush1.msra.mxu0 %v708
    %820 = vmatprep.subr.mxu0 %v711
    %821 = vmatpush1.msra.mxu0 %v710
    %822 = vmatprep.subr.mxu0 %v713
    %823 = vmatpush1.msra.mxu0 %v712
    %824 = vmatprep.subr.mxu0 %v715
    %825 = vmatpush1.msra.mxu0 %v714
    %826 = vmatprep.subr.mxu0 %v717
    %827 = vmatpush1.msra.mxu0 %v716
    %828 = vmatprep.subr.mxu0 0.0
    %829 = vmatpush1.msra.mxu0 0.0
    %830 = vmatprep.subr.mxu0 0.0
    %831 = vmatpush1.msra.mxu0 0.0
    %832 = vmatprep.subr.mxu0 0.0
    %833 = vmatpush1.msra.mxu0 0.0
    %834 = vmatprep.subr.mxu0 0.0
    %835 = vmatpush1.msra.mxu0 0.0
    %836 = vmatprep.subr.mxu0 0.0
    %837 = vmatpush1.msra.mxu0 0.0
    %838 = vmatprep.subr.mxu0 0.0
    %839 = vmatpush1.msra.mxu0 0.0
    %840 = vmatprep.subr.mxu0 0.0
    %841 = vmatpush1.msra.mxu0 0.0
    %842 = vmatprep.subr.mxu0 0.0
    %843 = vmatpush1.msra.mxu0 0.0
    %844 = vmatprep.subr.mxu0 0.0
    %845 = vmatpush1.msra.mxu0 0.0
    %846 = vmatprep.subr.mxu0 0.0
    %847 = vmatpush1.msra.mxu0 0.0
    %848 = vmatprep.subr.mxu0 0.0
    %849 = vmatpush1.msra.mxu0 0.0
    %850 = vmatprep.subr.mxu0 0.0
    %851 = vmatpush1.msra.mxu0 0.0
    %852 = vmatprep.subr.mxu0 0.0
    %853 = vmatpush1.msra.mxu0 0.0
    %854 = vmatprep.subr.mxu0 0.0
    %855 = vmatpush1.msra.mxu0 0.0
    %856 = vmatprep.subr.mxu0 0.0
    %857 = vmatpush1.msra.mxu0 0.0
    %858 = vmatprep.subr.mxu0 0.0
    %859 = vmatpush1.msra.mxu0 0.0
    %860 = vmatprep.subr.mxu0 0.0
    %861 = vmatpush1.msra.mxu0 0.0
    %862 = vmatprep.subr.mxu0 0.0
    %863 = vmatpush1.msra.mxu0 0.0
    %864 = vmatprep.subr.mxu0 0.0
    %865 = vmatpush1.msra.mxu0 0.0
    %866 = vmatprep.subr.mxu0 0.0
    %867 = vmatpush1.msra.mxu0 0.0
    %868 = vmatprep.subr.mxu0 0.0
    %869 = vmatpush1.msra.mxu0 0.0
    %870 = vmatprep.subr.mxu0 0.0
    %871 = vmatpush1.msra.mxu0 0.0
    %872 = vmatprep.subr.mxu0 0.0
    %873 = vmatpush1.msra.mxu0 0.0
    %874 = vmatprep.subr.mxu0 0.0
    %875 = vmatpush1.msra.mxu0 0.0
    %876 = vmatprep.mubr.f32.mxu0 0.0
    %877 = vmatmul.mubr.f32.gmra.mrb[0].mxu0 %v810
    %v878 = vpop.f32.mrb[0].mxu0
    %v879 = vadd.f32 %v805, %v878
    %v880 = vpop.f32.mrb[0].mxu0
    %v881 = vadd.f32 %v807, %v880
    %882 = vdwg.mxu0
    %v883 = vld [vmem:[#allocation10 + $0x7] sm:$0x1]
    %v884 = vlaneseq
    %v885 = vshrl.u32 %v884, 7
    %v886 = vsub.s32 0, %v885
    %v887 = vrot.slane %v883, %v886
    %v888 = vadd.f32 %v879, %v887
    %v889 = vld [vmem:[#allocation10 + $0x8] sm:$0x1]
    %v890 = vld [vmem:[#allocation10 + $0x9] sm:$0x1]
    %891 = vmatprep.subr.mxu0 0.0
    %892 = vmatpush1.msra.mxu0 %v87
    %893 = vmatprep.subr.mxu0 0.0
    %894 = vmatpush1.msra.mxu0 %v88
    %895 = vmatprep.subr.mxu0 0.0
    %896 = vmatpush1.msra.mxu0 %v89
    %897 = vmatprep.subr.mxu0 0.0
    %898 = vmatpush1.msra.mxu0 %v90
    %899 = vmatprep.subr.mxu0 0.0
    %900 = vmatpush1.msra.mxu0 %v91
    %901 = vmatprep.subr.mxu0 0.0
    %902 = vmatpush1.msra.mxu0 %v92
    %903 = vmatprep.subr.mxu0 0.0
    %904 = vmatpush1.msra.mxu0 %v93
    %905 = vmatprep.subr.mxu0 0.0
    %906 = vmatpush1.msra.mxu0 %v94
    %907 = vmatprep.subr.mxu0 0.0
    %908 = vmatpush1.msra.mxu0 %v95
    %909 = vmatprep.subr.mxu0 0.0
    %910 = vmatpush1.msra.mxu0 %v96
    %911 = vmatprep.subr.mxu0 0.0
    %912 = vmatpush1.msra.mxu0 %v97
    %913 = vmatprep.subr.mxu0 0.0
    %914 = vmatpush1.msra.mxu0 %v98
    %915 = vmatprep.subr.mxu0 0.0
    %916 = vmatpush1.msra.mxu0 %v99
    %917 = vmatprep.subr.mxu0 0.0
    %918 = vmatpush1.msra.mxu0 %v100
    %919 = vmatprep.subr.mxu0 0.0
    %920 = vmatpush1.msra.mxu0 %v101
    %921 = vmatprep.subr.mxu0 0.0
    %922 = vmatpush1.msra.mxu0 %v102
    %923 = vmatprep.subr.mxu0 0.0
    %924 = vmatpush1.msra.mxu0 0.0
    %925 = vmatprep.subr.mxu0 0.0
    %926 = vmatpush1.msra.mxu0 0.0
    %927 = vmatprep.subr.mxu0 0.0
    %928 = vmatpush1.msra.mxu0 0.0
    %929 = vmatprep.subr.mxu0 0.0
    %930 = vmatpush1.msra.mxu0 0.0
    %931 = vmatprep.subr.mxu0 0.0
    %932 = vmatpush1.msra.mxu0 0.0
    %933 = vmatprep.subr.mxu0 0.0
    %934 = vmatpush1.msra.mxu0 0.0
    %935 = vmatprep.subr.mxu0 0.0
    %936 = vmatpush1.msra.mxu0 0.0
    %937 = vmatprep.subr.mxu0 0.0
    %938 = vmatpush1.msra.mxu0 0.0
    %939 = vmatprep.subr.mxu0 0.0
    %940 = vmatpush1.msra.mxu0 0.0
    %941 = vmatprep.subr.mxu0 0.0
    %942 = vmatpush1.msra.mxu0 0.0
    %943 = vmatprep.subr.mxu0 0.0
    %944 = vmatpush1.msra.mxu0 0.0
    %945 = vmatprep.subr.mxu0 0.0
    %946 = vmatpush1.msra.mxu0 0.0
    %947 = vmatprep.subr.mxu0 0.0
    %948 = vmatpush1.msra.mxu0 0.0
    %949 = vmatprep.subr.mxu0 0.0
    %950 = vmatpush1.msra.mxu0 0.0
    %951 = vmatprep.subr.mxu0 0.0
    %952 = vmatpush1.msra.mxu0 0.0
    %953 = vmatprep.subr.mxu0 0.0
    %954 = vmatpush1.msra.mxu0 0.0
    %955 = vmatprep.mubr.f32.mxu0 0.0
    %956 = vmatmul.mubr.f32.gmra.mrb[0].mxu0 %v888
    %v957 = vpop.f32.mrb[0].mxu0
    %v958 = vadd.f32 0.0, %v957
    %v959 = vpop.f32.mrb[0].mxu0
    %960 = vdwg.mxu0
    %v961 = vsub.f32 %v888, %v958
    %v962 = vmul.f32 %v961, %v961
    %963 = vmatprep.subr.mxu0 0.0
    %964 = vmatpush1.msra.mxu0 %v87
    %965 = vmatprep.subr.mxu0 0.0
    %966 = vmatpush1.msra.mxu0 %v88
    %967 = vmatprep.subr.mxu0 0.0
    %968 = vmatpush1.msra.mxu0 %v89
    %969 = vmatprep.subr.mxu0 0.0
    %970 = vmatpush1.msra.mxu0 %v90
    %971 = vmatprep.subr.mxu0 0.0
    %972 = vmatpush1.msra.mxu0 %v91
    %973 = vmatprep.subr.mxu0 0.0
    %974 = vmatpush1.msra.mxu0 %v92
    %975 = vmatprep.subr.mxu0 0.0
    %976 = vmatpush1.msra.mxu0 %v93
    %977 = vmatprep.subr.mxu0 0.0
    %978 = vmatpush1.msra.mxu0 %v94
    %979 = vmatprep.subr.mxu0 0.0
    %980 = vmatpush1.msra.mxu0 %v95
    %981 = vmatprep.subr.mxu0 0.0
    %982 = vmatpush1.msra.mxu0 %v96
    %983 = vmatprep.subr.mxu0 0.0
    %984 = vmatpush1.msra.mxu0 %v97
    %985 = vmatprep.subr.mxu0 0.0
    %986 = vmatpush1.msra.mxu0 %v98
    %987 = vmatprep.subr.mxu0 0.0
    %988 = vmatpush1.msra.mxu0 %v99
    %989 = vmatprep.subr.mxu0 0.0
    %990 = vmatpush1.msra.mxu0 %v100
    %991 = vmatprep.subr.mxu0 0.0
    %992 = vmatpush1.msra.mxu0 %v101
    %993 = vmatprep.subr.mxu0 0.0
    %994 = vmatpush1.msra.mxu0 %v102
    %995 = vmatprep.subr.mxu0 0.0
    %996 = vmatpush1.msra.mxu0 0.0
    %997 = vmatprep.subr.mxu0 0.0
    %998 = vmatpush1.msra.mxu0 0.0
    %999 = vmatprep.subr.mxu0 0.0
    %1000 = vmatpush1.msra.mxu0 0.0
    %1001 = vmatprep.subr.mxu0 0.0
    %1002 = vmatpush1.msra.mxu0 0.0
    %1003 = vmatprep.subr.mxu0 0.0
    %1004 = vmatpush1.msra.mxu0 0.0
    %1005 = vmatprep.subr.mxu0 0.0
    %1006 = vmatpush1.msra.mxu0 0.0
    %1007 = vmatprep.subr.mxu0 0.0
    %1008 = vmatpush1.msra.mxu0 0.0
    %1009 = vmatprep.subr.mxu0 0.0
    %1010 = vmatpush1.msra.mxu0 0.0
    %1011 = vmatprep.subr.mxu0 0.0
    %1012 = vmatpush1.msra.mxu0 0.0
    %1013 = vmatprep.subr.mxu0 0.0
    %1014 = vmatpush1.msra.mxu0 0.0
    %1015 = vmatprep.subr.mxu0 0.0
    %1016 = vmatpush1.msra.mxu0 0.0
    %1017 = vmatprep.subr.mxu0 0.0
    %1018 = vmatpush1.msra.mxu0 0.0
    %1019 = vmatprep.subr.mxu0 0.0
    %1020 = vmatpush1.msra.mxu0 0.0
    %1021 = vmatprep.subr.mxu0 0.0
    %1022 = vmatpush1.msra.mxu0 0.0
    %1023 = vmatprep.subr.mxu0 0.0
    %1024 = vmatpush1.msra.mxu0 0.0
    %1025 = vmatprep.subr.mxu0 0.0
    %1026 = vmatpush1.msra.mxu0 0.0
    %1027 = vmatprep.mubr.f32.mxu0 0.0
    %1028 = vmatmul.mubr.f32.gmra.mrb[0].mxu0 %v962
    %v1029 = vpop.f32.mrb[0].mxu0
    %v1030 = vadd.f32 1e-05, %v1029
    %v1031 = vpop.f32.mrb[0].mxu0
    %1032 = vdwg.mxu0
    %v1033 = vrsqrt.pop %v1030
    %v1034 = vmul.f32 %v961, %v1033
    %v1035 = vlaneseq
    %v1036 = vshrl.u32 %v1035, 7
    %v1037 = vsub.s32 0, %v1036
    %v1038 = vrot.slane %v889, %v1037
    %v1039 = vmul.f32 %v1034, %v1038
    %v1040 = vlaneseq
    %v1041 = vshrl.u32 %v1040, 7
    %v1042 = vsub.s32 0, %v1041
    %v1043 = vrot.slane %v890, %v1042
    %v1044 = vadd.f32 %v1039, %v1043
    %v1045 = vmax.f32 %v1044, 0.0
    %s1046 = scalar_lea.vmem [#allocation7], 1280
    %v1047 = vld [vmem:[%s1046] sm:$0xff]
    %v1048 = vld [vmem:[%s1046 + $0x10] sm:$0xff]
    %v1049 = vld [vmem:[%s1046 + $0x20] sm:$0xff]
    %v1050 = vld [vmem:[%s1046 + $0x30] sm:$0xff]
    %v1051 = vld [vmem:[%s1046 + $0x40] sm:$0xff]
    %v1052 = vld [vmem:[%s1046 + $0x50] sm:$0xff]
    %v1053 = vld [vmem:[%s1046 + $0x60] sm:$0xff]
    %v1054 = vld [vmem:[%s1046 + $0x70] sm:$0xff]
    %v1055 = vld [vmem:[%s1046 + $0x80] sm:$0xff]
    %v1056 = vld [vmem:[%s1046 + $0x90] sm:$0xff]
    %v1057 = vld [vmem:[%s1046 + $0xa0] sm:$0xff]
    %v1058 = vld [vmem:[%s1046 + $0xb0] sm:$0xff]
    %v1059 = vld [vmem:[%s1046 + $0xc0] sm:$0xff]
    %v1060 = vld [vmem:[%s1046 + $0xd0] sm:$0xff]
    %v1061 = vld [vmem:[%s1046 + $0xe0] sm:$0xff]
    %v1062 = vld [vmem:[%s1046 + $0xf0] sm:$0xff]
    %v1063 = vld [vmem:[#allocation10 + $0xa] sm:$0x1]
    %v1064 = vlaneseq
    %v1065 = vshrl.u32 %v1064, 7
    %v1066 = vsub.s32 0, %v1065
    %v1067 = vrot.slane %v1063, %v1066
    %1068 = vmatprep.subr.mxu0 0.0
    %1069 = vmatpush1.msra.mxu0 %v1047
    %1070 = vmatprep.subr.mxu0 0.0
    %1071 = vmatpush1.msra.mxu0 %v1048
    %1072 = vmatprep.subr.mxu0 0.0
    %1073 = vmatpush1.msra.mxu0 %v1049
    %1074 = vmatprep.subr.mxu0 0.0
    %1075 = vmatpush1.msra.mxu0 %v1050
    %1076 = vmatprep.subr.mxu0 0.0
    %1077 = vmatpush1.msra.mxu0 %v1051
    %1078 = vmatprep.subr.mxu0 0.0
    %1079 = vmatpush1.msra.mxu0 %v1052
    %1080 = vmatprep.subr.mxu0 0.0
    %1081 = vmatpush1.msra.mxu0 %v1053
    %1082 = vmatprep.subr.mxu0 0.0
    %1083 = vmatpush1.msra.mxu0 %v1054
    %1084 = vmatprep.subr.mxu0 0.0
    %1085 = vmatpush1.msra.mxu0 %v1055
    %1086 = vmatprep.subr.mxu0 0.0
    %1087 = vmatpush1.msra.mxu0 %v1056
    %1088 = vmatprep.subr.mxu0 0.0
    %1089 = vmatpush1.msra.mxu0 %v1057
    %1090 = vmatprep.subr.mxu0 0.0
    %1091 = vmatpush1.msra.mxu0 %v1058
    %1092 = vmatprep.subr.mxu0 0.0
    %1093 = vmatpush1.msra.mxu0 %v1059
    %1094 = vmatprep.subr.mxu0 0.0
    %1095 = vmatpush1.msra.mxu0 %v1060
    %1096 = vmatprep.subr.mxu0 0.0
    %1097 = vmatpush1.msra.mxu0 %v1061
    %1098 = vmatprep.subr.mxu0 0.0
    %1099 = vmatpush1.msra.mxu0 %v1062
    %1100 = vmatprep.subr.mxu0 0.0
    %1101 = vmatpush1.msra.mxu0 0.0
    %1102 = vmatprep.subr.mxu0 0.0
    %1103 = vmatpush1.msra.mxu0 0.0
    %1104 = vmatprep.subr.mxu0 0.0
    %1105 = vmatpush1.msra.mxu0 0.0
    %1106 = vmatprep.subr.mxu0 0.0
    %1107 = vmatpush1.msra.mxu0 0.0
    %1108 = vmatprep.subr.mxu0 0.0
    %1109 = vmatpush1.msra.mxu0 0.0
    %1110 = vmatprep.subr.mxu0 0.0
    %1111 = vmatpush1.msra.mxu0 0.0
    %1112 = vmatprep.subr.mxu0 0.0
    %1113 = vmatpush1.msra.mxu0 0.0
    %1114 = vmatprep.subr.mxu0 0.0
    %1115 = vmatpush1.msra.mxu0 0.0
    %1116 = vmatprep.subr.mxu0 0.0
    %1117 = vmatpush1.msra.mxu0 0.0
    %1118 = vmatprep.subr.mxu0 0.0
    %1119 = vmatpush1.msra.mxu0 0.0
    %1120 = vmatprep.subr.mxu0 0.0
    %1121 = vmatpush1.msra.mxu0 0.0
    %1122 = vmatprep.subr.mxu0 0.0
    %1123 = vmatpush1.msra.mxu0 0.0
    %1124 = vmatprep.subr.mxu0 0.0
    %1125 = vmatpush1.msra.mxu0 0.0
    %1126 = vmatprep.subr.mxu0 0.0
    %1127 = vmatpush1.msra.mxu0 0.0
    %1128 = vmatprep.subr.mxu0 0.0
    %1129 = vmatpush1.msra.mxu0 0.0
    %1130 = vmatprep.subr.mxu0 0.0
    %1131 = vmatpush1.msra.mxu0 0.0
    %1132 = vmatprep.mubr.f32.mxu0 0.0
    %1133 = vmatmul.mubr.f32.gmra.mrb[0].mxu0 %v1045
    %v1134 = vpop.f32.mrb[0].mxu0
    %v1135 = vadd.f32 %v1067, %v1134
    %v1136 = vpop.f32.mrb[0].mxu0
    %1137 = vdwg.mxu0
    %v1138 = vld [vmem:[#allocation10 + $0xb] sm:$0x1]
    %v1139 = vld [vmem:[#allocation10 + $0xc] sm:$0x1]
    %1140 = vmatprep.subr.mxu0 0.0
    %1141 = vmatpush1.msra.mxu0 %v87
    %1142 = vmatprep.subr.mxu0 0.0
    %1143 = vmatpush1.msra.mxu0 %v88
    %1144 = vmatprep.subr.mxu0 0.0
    %1145 = vmatpush1.msra.mxu0 %v89
    %1146 = vmatprep.subr.mxu0 0.0
    %1147 = vmatpush1.msra.mxu0 %v90
    %1148 = vmatprep.subr.mxu0 0.0
    %1149 = vmatpush1.msra.mxu0 %v91
    %1150 = vmatprep.subr.mxu0 0.0
    %1151 = vmatpush1.msra.mxu0 %v92
    %1152 = vmatprep.subr.mxu0 0.0
    %1153 = vmatpush1.msra.mxu0 %v93
    %1154 = vmatprep.subr.mxu0 0.0
    %1155 = vmatpush1.msra.mxu0 %v94
    %1156 = vmatprep.subr.mxu0 0.0
    %1157 = vmatpush1.msra.mxu0 %v95
    %1158 = vmatprep.subr.mxu0 0.0
    %1159 = vmatpush1.msra.mxu0 %v96
    %1160 = vmatprep.subr.mxu0 0.0
    %1161 = vmatpush1.msra.mxu0 %v97
    %1162 = vmatprep.subr.mxu0 0.0
    %1163 = vmatpush1.msra.mxu0 %v98
    %1164 = vmatprep.subr.mxu0 0.0
    %1165 = vmatpush1.msra.mxu0 %v99
    %1166 = vmatprep.subr.mxu0 0.0
    %1167 = vmatpush1.msra.mxu0 %v100
    %1168 = vmatprep.subr.mxu0 0.0
    %1169 = vmatpush1.msra.mxu0 %v101
    %1170 = vmatprep.subr.mxu0 0.0
    %1171 = vmatpush1.msra.mxu0 %v102
    %1172 = vmatprep.subr.mxu0 0.0
    %1173 = vmatpush1.msra.mxu0 0.0
    %1174 = vmatprep.subr.mxu0 0.0
    %1175 = vmatpush1.msra.mxu0 0.0
    %1176 = vmatprep.subr.mxu0 0.0
    %1177 = vmatpush1.msra.mxu0 0.0
    %1178 = vmatprep.subr.mxu0 0.0
    %1179 = vmatpush1.msra.mxu0 0.0
    %1180 = vmatprep.subr.mxu0 0.0
    %1181 = vmatpush1.msra.mxu0 0.0
    %1182 = vmatprep.subr.mxu0 0.0
    %1183 = vmatpush1.msra.mxu0 0.0
    %1184 = vmatprep.subr.mxu0 0.0
    %1185 = vmatpush1.msra.mxu0 0.0
    %1186 = vmatprep.subr.mxu0 0.0
    %1187 = vmatpush1.msra.mxu0 0.0
    %1188 = vmatprep.subr.mxu0 0.0
    %1189 = vmatpush1.msra.mxu0 0.0
    %1190 = vmatprep.subr.mxu0 0.0
    %1191 = vmatpush1.msra.mxu0 0.0
    %1192 = vmatprep.subr.mxu0 0.0
    %1193 = vmatpush1.msra.mxu0 0.0
    %1194 = vmatprep.subr.mxu0 0.0
    %1195 = vmatpush1.msra.mxu0 0.0
    %1196 = vmatprep.subr.mxu0 0.0
    %1197 = vmatpush1.msra.mxu0 0.0
    %1198 = vmatprep.subr.mxu0 0.0
    %1199 = vmatpush1.msra.mxu0 0.0
    %1200 = vmatprep.subr.mxu0 0.0
    %1201 = vmatpush1.msra.mxu0 0.0
    %1202 = vmatprep.subr.mxu0 0.0
    %1203 = vmatpush1.msra.mxu0 0.0
    %1204 = vmatprep.mubr.f32.mxu0 0.0
    %1205 = vmatmul.mubr.f32.gmra.mrb[0].mxu0 %v1135
    %v1206 = vpop.f32.mrb[0].mxu0
    %v1207 = vadd.f32 0.0, %v1206
    %v1208 = vpop.f32.mrb[0].mxu0
    %1209 = vdwg.mxu0
    %v1210 = vsub.f32 %v1135, %v1207
    %v1211 = vmul.f32 %v1210, %v1210
    %1212 = vmatprep.subr.mxu0 0.0
    %1213 = vmatpush1.msra.mxu0 %v87
    %1214 = vmatprep.subr.mxu0 0.0
    %1215 = vmatpush1.msra.mxu0 %v88
    %1216 = vmatprep.subr.mxu0 0.0
    %1217 = vmatpush1.msra.mxu0 %v89
    %1218 = vmatprep.subr.mxu0 0.0
    %1219 = vmatpush1.msra.mxu0 %v90
    %1220 = vmatprep.subr.mxu0 0.0
    %1221 = vmatpush1.msra.mxu0 %v91
    %1222 = vmatprep.subr.mxu0 0.0
    %1223 = vmatpush1.msra.mxu0 %v92
    %1224 = vmatprep.subr.mxu0 0.0
    %1225 = vmatpush1.msra.mxu0 %v93
    %1226 = vmatprep.subr.mxu0 0.0
    %1227 = vmatpush1.msra.mxu0 %v94
    %1228 = vmatprep.subr.mxu0 0.0
    %1229 = vmatpush1.msra.mxu0 %v95
    %1230 = vmatprep.subr.mxu0 0.0
    %1231 = vmatpush1.msra.mxu0 %v96
    %1232 = vmatprep.subr.mxu0 0.0
    %1233 = vmatpush1.msra.mxu0 %v97
    %1234 = vmatprep.subr.mxu0 0.0
    %1235 = vmatpush1.msra.mxu0 %v98
    %1236 = vmatprep.subr.mxu0 0.0
    %1237 = vmatpush1.msra.mxu0 %v99
    %1238 = vmatprep.subr.mxu0 0.0
    %1239 = vmatpush1.msra.mxu0 %v100
    %1240 = vmatprep.subr.mxu0 0.0
    %1241 = vmatpush1.msra.mxu0 %v101
    %1242 = vmatprep.subr.mxu0 0.0
    %1243 = vmatpush1.msra.mxu0 %v102
    %1244 = vmatprep.subr.mxu0 0.0
    %1245 = vmatpush1.msra.mxu0 0.0
    %1246 = vmatprep.subr.mxu0 0.0
    %1247 = vmatpush1.msra.mxu0 0.0
    %1248 = vmatprep.subr.mxu0 0.0
    %1249 = vmatpush1.msra.mxu0 0.0
    %1250 = vmatprep.subr.mxu0 0.0
    %1251 = vmatpush1.msra.mxu0 0.0
    %1252 = vmatprep.subr.mxu0 0.0
    %1253 = vmatpush1.msra.mxu0 0.0
    %1254 = vmatprep.subr.mxu0 0.0
    %1255 = vmatpush1.msra.mxu0 0.0
    %1256 = vmatprep.subr.mxu0 0.0
    %1257 = vmatpush1.msra.mxu0 0.0
    %1258 = vmatprep.subr.mxu0 0.0
    %1259 = vmatpush1.msra.mxu0 0.0
    %1260 = vmatprep.subr.mxu0 0.0
    %1261 = vmatpush1.msra.mxu0 0.0
    %1262 = vmatprep.subr.mxu0 0.0
    %1263 = vmatpush1.msra.mxu0 0.0
    %1264 = vmatprep.subr.mxu0 0.0
    %1265 = vmatpush1.msra.mxu0 0.0
    %1266 = vmatprep.subr.mxu0 0.0
    %1267 = vmatpush1.msra.mxu0 0.0
    %1268 = vmatprep.subr.mxu0 0.0
    %1269 = vmatpush1.msra.mxu0 0.0
    %1270 = vmatprep.subr.mxu0 0.0
    %1271 = vmatpush1.msra.mxu0 0.0
    %1272 = vmatprep.subr.mxu0 0.0
    %1273 = vmatpush1.msra.mxu0 0.0
    %1274 = vmatprep.subr.mxu0 0.0
    %1275 = vmatpush1.msra.mxu0 0.0
    %1276 = vmatprep.mubr.f32.mxu0 0.0
    %1277 = vmatmul.mubr.f32.gmra.mrb[0].mxu0 %v1211
    %v1278 = vpop.f32.mrb[0].mxu0
    %v1279 = vadd.f32 1e-05, %v1278
    %v1280 = vpop.f32.mrb[0].mxu0
    %1281 = vdwg.mxu0
    %v1282 = vrsqrt.pop %v1279
    %v1283 = vmul.f32 %v1210, %v1282
    %v1284 = vlaneseq
    %v1285 = vshrl.u32 %v1284, 7
    %v1286 = vsub.s32 0, %v1285
    %v1287 = vrot.slane %v1138, %v1286
    %v1288 = vmul.f32 %v1283, %v1287
    %v1289 = vlaneseq
    %v1290 = vshrl.u32 %v1289, 7
    %v1291 = vsub.s32 0, %v1290
    %v1292 = vrot.slane %v1139, %v1291
    %v1293 = vadd.f32 %v1288, %v1292
    %v1294 = vmax.f32 %v1293, 0.0
    %s1295 = scalar_lea.vmem [#allocation7], 1536
    %v1296 = vld [vmem:[%s1295] sm:$0xff]
    %v1297 = vld [vmem:[%s1295 + $0x10] sm:$0xff]
    %v1298 = vld [vmem:[%s1295 + $0x20] sm:$0xff]
    %v1299 = vld [vmem:[%s1295 + $0x30] sm:$0xff]
    %v1300 = vld [vmem:[%s1295 + $0x40] sm:$0xff]
    %v1301 = vld [vmem:[%s1295 + $0x50] sm:$0xff]
    %v1302 = vld [vmem:[%s1295 + $0x60] sm:$0xff]
    %v1303 = vld [vmem:[%s1295 + $0x70] sm:$0xff]
    %v1304 = vld [vmem:[%s1295 + $0x80] sm:$0xff]
    %v1305 = vld [vmem:[%s1295 + $0x90] sm:$0xff]
    %v1306 = vld [vmem:[%s1295 + $0xa0] sm:$0xff]
    %v1307 = vld [vmem:[%s1295 + $0xb0] sm:$0xff]
    %v1308 = vld [vmem:[%s1295 + $0xc0] sm:$0xff]
    %v1309 = vld [vmem:[%s1295 + $0xd0] sm:$0xff]
    %v1310 = vld [vmem:[%s1295 + $0xe0] sm:$0xff]
    %v1311 = vld [vmem:[%s1295 + $0xf0] sm:$0xff]
    %1312 = vmatprep.subr.mxu0 0.0
    %1313 = vmatpush1.msra.mxu0 %v1296
    %1314 = vmatprep.subr.mxu0 0.0
    %1315 = vmatpush1.msra.mxu0 %v1297
    %1316 = vmatprep.subr.mxu0 0.0
    %1317 = vmatpush1.msra.mxu0 %v1298
    %1318 = vmatprep.subr.mxu0 0.0
    %1319 = vmatpush1.msra.mxu0 %v1299
    %1320 = vmatprep.subr.mxu0 0.0
    %1321 = vmatpush1.msra.mxu0 %v1300
    %1322 = vmatprep.subr.mxu0 0.0
    %1323 = vmatpush1.msra.mxu0 %v1301
    %1324 = vmatprep.subr.mxu0 0.0
    %1325 = vmatpush1.msra.mxu0 %v1302
    %1326 = vmatprep.subr.mxu0 0.0
    %1327 = vmatpush1.msra.mxu0 %v1303
    %1328 = vmatprep.subr.mxu0 0.0
    %1329 = vmatpush1.msra.mxu0 %v1304
    %1330 = vmatprep.subr.mxu0 0.0
    %1331 = vmatpush1.msra.mxu0 %v1305
    %1332 = vmatprep.subr.mxu0 0.0
    %1333 = vmatpush1.msra.mxu0 %v1306
    %1334 = vmatprep.subr.mxu0 0.0
    %1335 = vmatpush1.msra.mxu0 %v1307
    %1336 = vmatprep.subr.mxu0 0.0
    %1337 = vmatpush1.msra.mxu0 %v1308
    %1338 = vmatprep.subr.mxu0 0.0
    %1339 = vmatpush1.msra.mxu0 %v1309
    %1340 = vmatprep.subr.mxu0 0.0
    %1341 = vmatpush1.msra.mxu0 %v1310
    %1342 = vmatprep.subr.mxu0 0.0
    %1343 = vmatpush1.msra.mxu0 %v1311
    %1344 = vmatprep.subr.mxu0 0.0
    %1345 = vmatpush1.msra.mxu0 0.0
    %1346 = vmatprep.subr.mxu0 0.0
    %1347 = vmatpush1.msra.mxu0 0.0
    %1348 = vmatprep.subr.mxu0 0.0
    %1349 = vmatpush1.msra.mxu0 0.0
    %1350 = vmatprep.subr.mxu0 0.0
    %1351 = vmatpush1.msra.mxu0 0.0
    %1352 = vmatprep.subr.mxu0 0.0
    %1353 = vmatpush1.msra.mxu0 0.0
    %1354 = vmatprep.subr.mxu0 0.0
    %1355 = vmatpush1.msra.mxu0 0.0
    %1356 = vmatprep.subr.mxu0 0.0
    %1357 = vmatpush1.msra.mxu0 0.0
    %1358 = vmatprep.subr.mxu0 0.0
    %1359 = vmatpush1.msra.mxu0 0.0
    %1360 = vmatprep.subr.mxu0 0.0
    %1361 = vmatpush1.msra.mxu0 0.0
    %1362 = vmatprep.subr.mxu0 0.0
    %1363 = vmatpush1.msra.mxu0 0.0
    %1364 = vmatprep.subr.mxu0 0.0
    %1365 = vmatpush1.msra.mxu0 0.0
    %1366 = vmatprep.subr.mxu0 0.0
    %1367 = vmatpush1.msra.mxu0 0.0
    %1368 = vmatprep.subr.mxu0 0.0
    %1369 = vmatpush1.msra.mxu0 0.0
    %1370 = vmatprep.subr.mxu0 0.0
    %1371 = vmatpush1.msra.mxu0 0.0
    %1372 = vmatprep.subr.mxu0 0.0
    %1373 = vmatpush1.msra.mxu0 0.0
    %1374 = vmatprep.subr.mxu0 0.0
    %1375 = vmatpush1.msra.mxu0 0.0
    %1376 = vmatprep.mubr.f32.mxu0 0.0
    %1377 = vmatmul.mubr.f32.gmra.mrb[0].mxu0 %v1294
    %v1378 = vpop.f32.mrb[0].mxu0
    %v1379 = vadd.f32 %v881, %v1378
    %v1380 = vpop.f32.mrb[0].mxu0
    %1381 = vdwg.mxu0
    %v1382 = vld [vmem:[#allocation10 + $0xd] sm:$0x1]
    %v1383 = vlaneseq
    %v1384 = vshrl.u32 %v1383, 7
    %v1385 = vsub.s32 0, %v1384
    %v1386 = vrot.slane %v1382, %v1385
    %v1387 = vadd.f32 %v1379, %v1386
    %vm1388 = vcmask 261120
    %1389 = vst.msk [vmem:[#allocation11] sm:$0xff] %vm1388, %v1387
    // Predicated region
    $region42: #{tpu_custom_call.1} parent=1 // pred_check
      _
    $region43: #{tpu_custom_call.1} parent=1 // pred_check_branch
      %1391 = sbr.rel (0) target = $region45
    $region44: #{tpu_custom_call.1} parent=1 // pred_region
      %s1393 = ssub.s32 128, 64
      %1394 = vsyncadd [#allocation4], %s1393
      %s1395 = sshll.u32 [#allocation11], 4
      %s1396 = int_to_ptr.vmem [resolvable:$true] %s1395
      %1401 = dma.vmem_to_hbm [thread:$0]  %s1396, 64, %s5, [#allocation4], 64, 64, 4
    $region45: #{tpu_custom_call.1} parent=1 // pred_fallthru
      _
    // Predicated region
    $region46: #{tpu_custom_call.1} parent=1 // pred_check
      _
    $region47: #{tpu_custom_call.1} parent=1 // pred_check_branch
      %1403 = sbr.rel (0) target = $region49
    $region48: #{tpu_custom_call.1} parent=1 // pred_region
      %1404 = dma.done [#allocation4], 128
    $region49: #{tpu_custom_call.1} parent=1 // pred_fallthru
      _
    %1405 = vsyncpa [#allocation3], 1
    %1406 = vsyncpa [#allocation6], 1
    %1407 = vsyncpa [#allocation9], 1
    %1408 = vsyncpa [#allocation4], 1

</llo_original>
